<compile_context>
chip_gen: v7x
topology: tpu7x:2x2x1
jax: 0.10.0
libtpu: 0.0.40
codegen_flags: <defaults>
</compile_context>

<pallas_src>
import functools

import jax
import jax.numpy as jnp
from jax import lax
from jax.experimental import pallas as pl
from jax.experimental.pallas import tpu as pltpu

LANES = 128
SUBLANES = 8
HEAD_HIDDEN = 1000       # PyTorch Linear(hidden, 1000)
HEAD_HIDDEN_PAD = 1024   # padded to a multiple of 128 lanes
W_DTYPE = jnp.bfloat16   # matmul operand dtype (f32 accumulation)


def _round_up(x, m):
    return (x + m - 1) // m * m


# ----------------------------------------------------------------------------
# Fused kernel: wavefront stacked-LSTM recurrence + Linear -> ReLU -> Linear.
# ----------------------------------------------------------------------------
def make_fused_kernel(num_layers, T, Bp, H):
    L = num_layers
    H4 = 4 * H
    W = L * H4
    S = T + L - 1          # wavefront steps

    def kernel(x_ref, wihx_ref, bias_ref, rhs_ref, w1_hbm, b1_ref, w2_hbm,
               b2_ref, out_ref, w1_vmem, w2_vmem, dma_sem):
        # Head weights are needed last -> start their HBM->VMEM DMA now and
        # hide it behind the whole recurrence; wait right before the head.
        w1_cp = pltpu.make_async_copy(w1_hbm, w1_vmem, dma_sem.at[0])
        w2_cp = pltpu.make_async_copy(w2_hbm, w2_vmem, dma_sem.at[1])
        w1_cp.start()
        w2_cp.start()

        # Hoisted per-lane activation constants.  Gates are packed [i, f, o, g]
        # in each 4H block; sigmoid(x) = 0.5*tanh(0.5*x) + 0.5 on the first 3H
        # lanes, plain tanh on the last H lanes -> one tanh pass per step.
        lane = lax.broadcasted_iota(jnp.int32, (Bp, W), 1)
        is_sig = (lane % H4) < 3 * H
        scale = jnp.where(is_sig, 0.5, 1.0)
        offset = jnp.where(is_sig, 0.5, 0.0)

        # Hoisted layer-0 input projection (+ every layer's fused bias) for all
        # wavefront steps: one (S*Bp, in) x (in, L*4H) matmul.
        gx = jnp.dot(x_ref[...].astype(W_DTYPE), wihx_ref[...],
                     preferred_element_type=jnp.float32) + bias_ref[...]

        rhs = rhs_ref[...]          # (L*H, L*4H) block-bidiagonal, bf16

        h = [jnp.zeros((Bp, H), jnp.float32) for _ in range(L)]
        c = [jnp.zeros((Bp, H), jnp.float32) for _ in range(L)]

        # Wavefront over the (layer, time) grid.  S is small and static ->
        # Python unroll.  TODO(synk): switch to lax.fori_loop(..., unroll=True)
        # if T grows beyond ~32 to bound vreg live ranges.
        for s in range(S):
            lhs = h[0] if L == 1 else jnp.concatenate(h, axis=1)   # (Bp, L*H)
            mm = jnp.dot(lhs.astype(W_DTYPE), rhs,
                         preferred_element_type=jnp.float32)       # (Bp, L*4H)
            g = gx[s * Bp:(s + 1) * Bp, :] + mm     # vreg-aligned row slab
            act = scale * jnp.tanh(scale * g) + offset
            for l in range(L):
                t = s - l
                if 0 <= t < T:                      # layer l valid this step
                    blk = act[:, l * H4:(l + 1) * H4]
                    i_g = blk[:, 0 * H:1 * H]
                    f_g = blk[:, 1 * H:2 * H]
                    o_g = blk[:, 2 * H:3 * H]
                    g_g = blk[:, 3 * H:4 * H]
                    c[l] = f_g * c[l] + i_g * g_g
                    h[l] = o_g * jnp.tanh(c[l])

        # Head on the last timestep of the last layer:
        # Linear(H -> 1000, padded 1024) -> ReLU -> Dropout(identity) ->
        # Linear(1000 -> out, padded to 128 lanes).
        # TODO(synk): training-mode dropout would need pltpu.prng_seed +
        # pltpu.prng_random_bits masking between the two matmuls.
        h_last = h[L - 1].astype(W_DTYPE)
        w1_cp.wait()
        z = jnp.dot(h_last, w1_vmem[...],
                    preferred_element_type=jnp.float32) + b1_ref[...]
        z = jnp.maximum(z, 0.0)
        w2_cp.wait()
        out_ref[...] = jnp.dot(z.astype(W_DTYPE), w2_vmem[...],
                               preferred_element_type=jnp.float32) + b2_ref[...]

    return kernel


# ----------------------------------------------------------------------------
# Wrapper
# ----------------------------------------------------------------------------
@functools.partial(jax.jit,
                   static_argnames=("num_layers", "hidden_size", "output_size"))
def lstm_model_forward(packed, x, *, num_layers, hidden_size, output_size):
    B, T, I = x.shape
    L, H = num_layers, hidden_size
    Bp = _round_up(max(B, SUBLANES), SUBLANES)
    S = T + L - 1
    out_pad = packed["b2"].shape[1]

    # Time-major, batch padded to a full sublane group, (L-1) zero tail steps so
    # every wavefront step reads a vreg-aligned (Bp, L*4H) slab of gx.
    xt = jnp.transpose(x, (1, 0, 2))                    # (T, B, I)
    xt = jnp.pad(xt, ((0, L - 1), (0, Bp - B), (0, 0))) # (S, Bp, I)
    x2d = xt.reshape(S * Bp, I)

    vmem = pl.BlockSpec(memory_space=pltpu.MemorySpace.VMEM)
    hbm = pl.BlockSpec(memory_space=pl.ANY)

    out = pl.pallas_call(
        make_fused_kernel(L, T, Bp, H),
        out_shape=jax.ShapeDtypeStruct((Bp, out_pad), jnp.float32),
        in_specs=[vmem, vmem, vmem, vmem, hbm, vmem, hbm, vmem],
        out_specs=vmem,
        scratch_shapes=[
            pltpu.VMEM(packed["w1"].shape, W_DTYPE),
            pltpu.VMEM(packed["w2"].shape, W_DTYPE),
            pltpu.SemaphoreType.DMA((2,)),
        ],
    )(x2d, packed["wihx"], packed["bias"], packed["rhs"],
      packed["w1"], packed["b1"], packed["w2"], packed["b2"])
    return out[:B, :output_size]


# ----------------------------------------------------------------------------
# Parameters
# ----------------------------------------------------------------------------
def init_params(key, input_size, hidden_size, num_layers, output_size):
    """PyTorch-equivalent f32 parameters (nn.LSTM/nn.Linear layouts, [i,f,g,o])."""
    params = {"lstm": []}
    k = 1.0 / float(hidden_size) ** 0.5
    for layer in range(num_layers):
        in_dim = input_size if layer == 0 else hidden_size
        key, k1, k2, k3, k4 = jax.random.split(key, 5)
        params["lstm"].append(dict(
            w_ih=jax.random.uniform(k1, (4 * hidden_size, in_dim), jnp.float32, -k, k),
            w_hh=jax.random.uniform(k2, (4 * hidden_size, hidden_size), jnp.float32, -k, k),
            b_ih=jax.random.uniform(k3, (4 * hidden_size,), jnp.float32, -k, k),
            b_hh=jax.random.uniform(k4, (4 * hidden_size,), jnp.float32, -k, k),
        ))
    key, k1, k2, k3, k4 = jax.random.split(key, 5)
    k1v = 1.0 / float(hidden_size) ** 0.5
    k2v = 1.0 / float(HEAD_HIDDEN) ** 0.5
    params["w1"] = jax.random.uniform(k1, (HEAD_HIDDEN, hidden_size), jnp.float32, -k1v, k1v)
    params["b1"] = jax.random.uniform(k2, (HEAD_HIDDEN,), jnp.float32, -k1v, k1v)
    params["w2"] = jax.random.uniform(k3, (output_size, HEAD_HIDDEN), jnp.float32, -k2v, k2v)
    params["b2"] = jax.random.uniform(k4, (output_size,), jnp.float32, -k2v, k2v)
    return params


def _reorder_ifgo_to_ifog(w, H):
    """PyTorch gate order [i,f,g,o] -> kernel order [i,f,o,g] along axis 0."""
    return jnp.concatenate([w[:2 * H], w[3 * H:4 * H], w[2 * H:3 * H]], axis=0)


def pack_params(params, hidden_size, output_size):
    """Kernel layout: wavefront block-bidiagonal recurrent RHS, widened layer-0
    input-projection weight, reordered gates, fused biases, bf16 matmul
    operands, zero-padded lane-dense head."""
    H = hidden_size
    H4 = 4 * H
    L = len(params["lstm"])
    W = L * H4
    input_size = params["lstm"][0]["w_ih"].shape[1]
    out_pad = _round_up(max(output_size, LANES), LANES)

    # Layer-0 input projection, widened to L*4H lanes (other blocks exactly 0).
    wih0 = _reorder_ifgo_to_ifog(params["lstm"][0]["w_ih"], H)      # (4H, I)
    wihx = jnp.zeros((input_size, W), jnp.float32).at[:, :H4].set(wih0.T)

    # All layers' fused biases in one (1, L*4H) row (added once per step).
    bias = jnp.zeros((1, W), jnp.float32)
    for l, lp in enumerate(params["lstm"]):
        b = _reorder_ifgo_to_ifog(lp["b_ih"] + lp["b_hh"], H)
        bias = bias.at[0, l * H4:(l + 1) * H4].set(b)

    # Wavefront recurrent RHS: block (l,l) = W_hh_l^T, block (l,l+1) = W_ih_{l+1}^T.
    rhs = jnp.zeros((L * H, W), jnp.float32)
    for l, lp in enumerate(params["lstm"]):
        rhs = rhs.at[l * H:(l + 1) * H, l * H4:(l + 1) * H4].set(
            _reorder_ifgo_to_ifog(lp["w_hh"], H).T)
        if l + 1 < L:
            rhs = rhs.at[l * H:(l + 1) * H, (l + 1) * H4:(l + 2) * H4].set(
                _reorder_ifgo_to_ifog(params["lstm"][l + 1]["w_ih"], H).T)

    # Zero-padded, lane-dense head (padding is exact: pad lanes contribute 0).
    w1 = jnp.zeros((H, HEAD_HIDDEN_PAD), jnp.float32).at[:, :HEAD_HIDDEN].set(params["w1"].T)
    b1 = jnp.zeros((1, HEAD_HIDDEN_PAD), jnp.float32).at[0, :HEAD_HIDDEN].set(params["b1"])
    w2 = jnp.zeros((HEAD_HIDDEN_PAD, out_pad), jnp.float32).at[:HEAD_HIDDEN, :output_size].set(params["w2"].T)
    b2 = jnp.zeros((1, out_pad), jnp.float32).at[0, :output_size].set(params["b2"])

    return dict(
        wihx=wihx.astype(W_DTYPE),     # (I, L*4H)
        bias=bias,                     # (1, L*4H) f32
        rhs=rhs.astype(W_DTYPE),       # (L*H, L*4H)
        w1=w1.astype(W_DTYPE), b1=b1,  # (H, 1024), (1, 1024)
        w2=w2.astype(W_DTYPE), b2=b2,  # (1024, out_pad), (1, out_pad)
    )


# ----------------------------------------------------------------------------
# Pure-JAX f32 reference (PyTorch semantics) for correctness checking.
# ----------------------------------------------------------------------------
def reference_forward(params, x):
    B, T, _ = x.shape
    seq = x.astype(jnp.float32)
    for lp in params["lstm"]:
        w_ih, w_hh = lp["w_ih"], lp["w_hh"]
        b = lp["b_ih"] + lp["b_hh"]
        H = w_hh.shape[1]
        h = jnp.zeros((B, H), jnp.float32)
        c = jnp.zeros((B, H), jnp.float32)
        outs = []
        for t in range(T):
            g = seq[:, t, :] @ w_ih.T + h @ w_hh.T + b
            i = jax.nn.sigmoid(g[:, 0 * H:1 * H])
            f = jax.nn.sigmoid(g[:, 1 * H:2 * H])
            gg = jnp.tanh(g[:, 2 * H:3 * H])
            o = jax.nn.sigmoid(g[:, 3 * H:4 * H])
            c = f * c + i * gg
            h = o * jnp.tanh(c)
            outs.append(h)
        seq = jnp.stack(outs, axis=1)
    z = jax.nn.relu(seq[:, -1, :] @ params["w1"].T + params["b1"])
    return z @ params["w2"].T + params["b2"]


if __name__ == "__main__":
    B, T = 2, 8
    input_size, hidden_size, num_layers, output_size = 4, 32, 2, 10
    dropout_rate = 0.5  # identity in eval mode

    key = jax.random.PRNGKey(0)
    kp, kx = jax.random.split(key)
    params = init_params(kp, input_size, hidden_size, num_layers, output_size)
    packed = pack_params(params, hidden_size, output_size)
    x = jax.random.normal(kx, (B, T, input_size), jnp.float32)

    out = lstm_model_forward(packed, x, num_layers=num_layers,
                             hidden_size=hidden_size, output_size=output_size)
    out = jax.block_until_ready(out)

    ref = reference_forward(params, x)
    assert out.shape == (B, output_size), out.shape
    assert jnp.all(jnp.isfinite(out))
    err = float(jnp.max(jnp.abs(out - ref)))
    assert err < 5e-2, f"max abs error vs f32 reference: {err}"
    print("KERNEL_OK")
</pallas_src>

<mosaic_0001>
module attributes {stable_mosaic.version = 11 : i64} {
  func.func @kernel(%arg0: memref<72x4xf32, #tpu.memory_space<vmem>>, %arg1: memref<4x256xbf16, #tpu.memory_space<vmem>>, %arg2: memref<1x256xf32, #tpu.memory_space<vmem>>, %arg3: memref<64x256xbf16, #tpu.memory_space<vmem>>, %arg4: memref<32x1024xbf16, #tpu.memory_space<any>>, %arg5: memref<1x1024xf32, #tpu.memory_space<vmem>>, %arg6: memref<1024x128xbf16, #tpu.memory_space<any>>, %arg7: memref<1x128xf32, #tpu.memory_space<vmem>>, %arg8: memref<8x128xf32, #tpu.memory_space<vmem>>, %arg9: memref<32x1024xbf16, #tpu.memory_space<vmem>>, %arg10: memref<1024x128xbf16, #tpu.memory_space<vmem>>, %arg11: memref<2x!tpu.dma_semaphore, #tpu.memory_space<semaphore_mem>>) attributes {dimension_semantics = [], scalar_prefetch = 0 : i64, scratch_operands = 3 : i64, tpu.core_type = #tpu.core_type<tc>} {
    %c0_i32 = arith.constant 0 : i32
    %0 = tpu.memref_slice %arg11[%c0_i32] : memref<2x!tpu.dma_semaphore, #tpu.memory_space<semaphore_mem>> -> memref<1x!tpu.dma_semaphore, #tpu.memory_space<semaphore_mem>>
    %1 = tpu.memref_squeeze %0 : memref<1x!tpu.dma_semaphore, #tpu.memory_space<semaphore_mem>> -> memref<!tpu.dma_semaphore, #tpu.memory_space<semaphore_mem>>
    tpu.enqueue_dma source(%arg4 : memref<32x1024xbf16, #tpu.memory_space<any>>) target(%arg9 : memref<32x1024xbf16, #tpu.memory_space<vmem>>) target_semaphore(%1 : memref<!tpu.dma_semaphore, #tpu.memory_space<semaphore_mem>>)
    %c1_i32 = arith.constant 1 : i32
    %2 = tpu.memref_slice %arg11[%c1_i32] : memref<2x!tpu.dma_semaphore, #tpu.memory_space<semaphore_mem>> -> memref<1x!tpu.dma_semaphore, #tpu.memory_space<semaphore_mem>>
    %3 = tpu.memref_squeeze %2 : memref<1x!tpu.dma_semaphore, #tpu.memory_space<semaphore_mem>> -> memref<!tpu.dma_semaphore, #tpu.memory_space<semaphore_mem>>
    tpu.enqueue_dma source(%arg6 : memref<1024x128xbf16, #tpu.memory_space<any>>) target(%arg10 : memref<1024x128xbf16, #tpu.memory_space<vmem>>) target_semaphore(%3 : memref<!tpu.dma_semaphore, #tpu.memory_space<semaphore_mem>>)
    %4 = tpu.iota {dimensions = array<i32: 1>} : vector<8x256xi32>
    %c128_i32 = arith.constant 128 : i32
    %c0_i32_0 = arith.constant 0 : i32
    %5 = arith.cmpi eq, %c128_i32, %c0_i32_0 : i32
    %c1_i32_1 = arith.constant 1 : i32
    %6 = arith.select %5, %c1_i32_1, %c128_i32 : i32
    %7 = vector.broadcast %6 : i32 to vector<8x256xi32>
    %8 = arith.remsi %4, %7 : vector<8x256xi32>
    %c0_i32_2 = arith.constant 0 : i32
    %9 = vector.broadcast %c0_i32_2 : i32 to vector<8x256xi32>
    %10 = arith.cmpi ne, %8, %9 : vector<8x256xi32>
    %c0_i32_3 = arith.constant 0 : i32
    %11 = vector.broadcast %c0_i32_3 : i32 to vector<8x256xi32>
    %12 = arith.cmpi slt, %8, %11 : vector<8x256xi32>
    %c0_i32_4 = arith.constant 0 : i32
    %13 = arith.cmpi slt, %6, %c0_i32_4 : i32
    %14 = vector.broadcast %13 : i1 to vector<8x256xi1>
    %15 = vector.broadcast %14 : vector<8x256xi1> to vector<8x256xi1>
    %16 = arith.xori %12, %15 : vector<8x256xi1>
    %17 = arith.andi %16, %10 : vector<8x256xi1>
    %18 = vector.broadcast %6 : i32 to vector<8x256xi32>
    %19 = arith.addi %8, %18 : vector<8x256xi32>
    %20 = arith.select %17, %19, %8 : vector<8x256xi1>, vector<8x256xi32>
    %c96_i32 = arith.constant 96 : i32
    %21 = vector.broadcast %c96_i32 : i32 to vector<8x256xi32>
    %22 = arith.cmpi slt, %20, %21 : vector<8x256xi32>
    %cst = arith.constant 5.000000e-01 : f32
    %cst_5 = arith.constant 1.000000e+00 : f32
    %23 = vector.broadcast %cst : f32 to vector<8x256xf32>
    %24 = vector.broadcast %cst_5 : f32 to vector<8x256xf32>
    %25 = arith.select %22, %23, %24 : vector<8x256xi1>, vector<8x256xf32>
    %cst_6 = arith.constant 5.000000e-01 : f32
    %cst_7 = arith.constant 0.000000e+00 : f32
    %26 = vector.broadcast %cst_6 : f32 to vector<8x256xf32>
    %27 = vector.broadcast %cst_7 : f32 to vector<8x256xf32>
    %28 = arith.select %22, %26, %27 : vector<8x256xi1>, vector<8x256xf32>
    %c0 = arith.constant 0 : index
    %c0_8 = arith.constant 0 : index
    %29 = vector.load %arg0[%c0, %c0_8] : memref<72x4xf32, #tpu.memory_space<vmem>>, vector<72x4xf32>
    %30 = arith.truncf %29 : vector<72x4xf32> to vector<72x4xbf16>
    %c0_9 = arith.constant 0 : index
    %c0_10 = arith.constant 0 : index
    %31 = vector.load %arg1[%c0_9, %c0_10] : memref<4x256xbf16, #tpu.memory_space<vmem>>, vector<4x256xbf16>
    %cst_11 = arith.constant dense<0.000000e+00> : vector<72x256xf32>
    %32 = tpu.matmul %30, %31, %cst_11 {dimension_numbers = #tpu.dot_dimension_numbers<[1], [0], [0], [1], [0, 0, 1, 1], [], []>} : vector<72x4xbf16>, vector<4x256xbf16>, vector<72x256xf32> -> vector<72x256xf32>
    %c0_12 = arith.constant 0 : index
    %c0_13 = arith.constant 0 : index
    %33 = vector.load %arg2[%c0_12, %c0_13] : memref<1x256xf32, #tpu.memory_space<vmem>>, vector<1x256xf32>
    %34 = vector.broadcast %33 : vector<1x256xf32> to vector<72x256xf32>
    %35 = arith.addf %32, %34 : vector<72x256xf32>
    %c0_14 = arith.constant 0 : index
    %c0_15 = arith.constant 0 : index
    %36 = vector.load %arg3[%c0_14, %c0_15] : memref<64x256xbf16, #tpu.memory_space<vmem>>, vector<64x256xbf16>
    %cst_16 = arith.constant 0.000000e+00 : f32
    %37 = vector.broadcast %cst_16 : f32 to vector<8x32xf32>
    %cst_17 = arith.constant 0.000000e+00 : f32
    %38 = vector.broadcast %cst_17 : f32 to vector<8x32xf32>
    %cst_18 = arith.constant 0.000000e+00 : f32
    %39 = vector.broadcast %cst_18 : f32 to vector<8x32xf32>
    %cst_19 = arith.constant 0.000000e+00 : f32
    %40 = vector.broadcast %cst_19 : f32 to vector<8x32xf32>
    %41 = tpu.concatenate %37, %38 in 1 : vector<8x32xf32>, vector<8x32xf32> -> vector<8x64xf32>
    %42 = arith.truncf %41 : vector<8x64xf32> to vector<8x64xbf16>
    %cst_20 = arith.constant dense<0.000000e+00> : vector<8x256xf32>
    %43 = tpu.matmul %42, %36, %cst_20 {dimension_numbers = #tpu.dot_dimension_numbers<[1], [0], [0], [1], [0, 0, 1, 1], [], []>} : vector<8x64xbf16>, vector<64x256xbf16>, vector<8x256xf32> -> vector<8x256xf32>
    %44 = vector.extract_strided_slice %35 {offsets = [0, 0], sizes = [8, 256], strides = [1, 1]} : vector<72x256xf32> to vector<8x256xf32>
    %45 = arith.addf %44, %43 : vector<8x256xf32>
    %46 = arith.mulf %25, %45 : vector<8x256xf32>
    %47 = math.tanh %46 : vector<8x256xf32>
    %48 = arith.mulf %25, %47 : vector<8x256xf32>
    %49 = arith.addf %48, %28 : vector<8x256xf32>
    %50 = vector.extract_strided_slice %49 {offsets = [0, 0], sizes = [8, 128], strides = [1, 1]} : vector<8x256xf32> to vector<8x128xf32>
    %51 = vector.extract_strided_slice %50 {offsets = [0, 0], sizes = [8, 32], strides = [1, 1]} : vector<8x128xf32> to vector<8x32xf32>
    %52 = vector.extract_strided_slice %50 {offsets = [0, 32], sizes = [8, 32], strides = [1, 1]} : vector<8x128xf32> to vector<8x32xf32>
    %53 = vector.extract_strided_slice %50 {offsets = [0, 64], sizes = [8, 32], strides = [1, 1]} : vector<8x128xf32> to vector<8x32xf32>
    %54 = vector.extract_strided_slice %50 {offsets = [0, 96], sizes = [8, 32], strides = [1, 1]} : vector<8x128xf32> to vector<8x32xf32>
    %55 = arith.mulf %52, %39 : vector<8x32xf32>
    %56 = arith.mulf %51, %54 : vector<8x32xf32>
    %57 = arith.addf %55, %56 : vector<8x32xf32>
    %58 = math.tanh %57 : vector<8x32xf32>
    %59 = arith.mulf %53, %58 : vector<8x32xf32>
    %60 = tpu.concatenate %59, %38 in 1 : vector<8x32xf32>, vector<8x32xf32> -> vector<8x64xf32>
    %61 = arith.truncf %60 : vector<8x64xf32> to vector<8x64xbf16>
    %cst_21 = arith.constant dense<0.000000e+00> : vector<8x256xf32>
    %62 = tpu.matmul %61, %36, %cst_21 {dimension_numbers = #tpu.dot_dimension_numbers<[1], [0], [0], [1], [0, 0, 1, 1], [], []>} : vector<8x64xbf16>, vector<64x256xbf16>, vector<8x256xf32> -> vector<8x256xf32>
    %63 = vector.extract_strided_slice %35 {offsets = [8, 0], sizes = [8, 256], strides = [1, 1]} : vector<72x256xf32> to vector<8x256xf32>
    %64 = arith.addf %63, %62 : vector<8x256xf32>
    %65 = arith.mulf %25, %64 : vector<8x256xf32>
    %66 = math.tanh %65 : vector<8x256xf32>
    %67 = arith.mulf %25, %66 : vector<8x256xf32>
    %68 = arith.addf %67, %28 : vector<8x256xf32>
    %69 = vector.extract_strided_slice %68 {offsets = [0, 0], sizes = [8, 128], strides = [1, 1]} : vector<8x256xf32> to vector<8x128xf32>
    %70 = vector.extract_strided_slice %69 {offsets = [0, 0], sizes = [8, 32], strides = [1, 1]} : vector<8x128xf32> to vector<8x32xf32>
    %71 = vector.extract_strided_slice %69 {offsets = [0, 32], sizes = [8, 32], strides = [1, 1]} : vector<8x128xf32> to vector<8x32xf32>
    %72 = vector.extract_strided_slice %69 {offsets = [0, 64], sizes = [8, 32], strides = [1, 1]} : vector<8x128xf32> to vector<8x32xf32>
    %73 = vector.extract_strided_slice %69 {offsets = [0, 96], sizes = [8, 32], strides = [1, 1]} : vector<8x128xf32> to vector<8x32xf32>
    %74 = arith.mulf %71, %57 : vector<8x32xf32>
    %75 = arith.mulf %70, %73 : vector<8x32xf32>
    %76 = arith.addf %74, %75 : vector<8x32xf32>
    %77 = math.tanh %76 : vector<8x32xf32>
    %78 = arith.mulf %72, %77 : vector<8x32xf32>
    %79 = vector.extract_strided_slice %68 {offsets = [0, 128], sizes = [8, 128], strides = [1, 1]} : vector<8x256xf32> to vector<8x128xf32>
    %80 = vector.extract_strided_slice %79 {offsets = [0, 0], sizes = [8, 32], strides = [1, 1]} : vector<8x128xf32> to vector<8x32xf32>
    %81 = vector.extract_strided_slice %79 {offsets = [0, 32], sizes = [8, 32], strides = [1, 1]} : vector<8x128xf32> to vector<8x32xf32>
    %82 = vector.extract_strided_slice %79 {offsets = [0, 64], sizes = [8, 32], strides = [1, 1]} : vector<8x128xf32> to vector<8x32xf32>
    %83 = vector.extract_strided_slice %79 {offsets = [0, 96], sizes = [8, 32], strides = [1, 1]} : vector<8x128xf32> to vector<8x32xf32>
    %84 = arith.mulf %81, %40 : vector<8x32xf32>
    %85 = arith.mulf %80, %83 : vector<8x32xf32>
    %86 = arith.addf %84, %85 : vector<8x32xf32>
    %87 = math.tanh %86 : vector<8x32xf32>
    %88 = arith.mulf %82, %87 : vector<8x32xf32>
    %89 = tpu.concatenate %78, %88 in 1 : vector<8x32xf32>, vector<8x32xf32> -> vector<8x64xf32>
    %90 = arith.truncf %89 : vector<8x64xf32> to vector<8x64xbf16>
    %cst_22 = arith.constant dense<0.000000e+00> : vector<8x256xf32>
    %91 = tpu.matmul %90, %36, %cst_22 {dimension_numbers = #tpu.dot_dimension_numbers<[1], [0], [0], [1], [0, 0, 1, 1], [], []>} : vector<8x64xbf16>, vector<64x256xbf16>, vector<8x256xf32> -> vector<8x256xf32>
    %92 = vector.extract_strided_slice %35 {offsets = [16, 0], sizes = [8, 256], strides = [1, 1]} : vector<72x256xf32> to vector<8x256xf32>
    %93 = arith.addf %92, %91 : vector<8x256xf32>
    %94 = arith.mulf %25, %93 : vector<8x256xf32>
    %95 = math.tanh %94 : vector<8x256xf32>
    %96 = arith.mulf %25, %95 : vector<8x256xf32>
    %97 = arith.addf %96, %28 : vector<8x256xf32>
    %98 = vector.extract_strided_slice %97 {offsets = [0, 0], sizes = [8, 128], strides = [1, 1]} : vector<8x256xf32> to vector<8x128xf32>
    %99 = vector.extract_strided_slice %98 {offsets = [0, 0], sizes = [8, 32], strides = [1, 1]} : vector<8x128xf32> to vector<8x32xf32>
    %100 = vector.extract_strided_slice %98 {offsets = [0, 32], sizes = [8, 32], strides = [1, 1]} : vector<8x128xf32> to vector<8x32xf32>
    %101 = vector.extract_strided_slice %98 {offsets = [0, 64], sizes = [8, 32], strides = [1, 1]} : vector<8x128xf32> to vector<8x32xf32>
    %102 = vector.extract_strided_slice %98 {offsets = [0, 96], sizes = [8, 32], strides = [1, 1]} : vector<8x128xf32> to vector<8x32xf32>
    %103 = arith.mulf %100, %76 : vector<8x32xf32>
    %104 = arith.mulf %99, %102 : vector<8x32xf32>
    %105 = arith.addf %103, %104 : vector<8x32xf32>
    %106 = math.tanh %105 : vector<8x32xf32>
    %107 = arith.mulf %101, %106 : vector<8x32xf32>
    %108 = vector.extract_strided_slice %97 {offsets = [0, 128], sizes = [8, 128], strides = [1, 1]} : vector<8x256xf32> to vector<8x128xf32>
    %109 = vector.extract_strided_slice %108 {offsets = [0, 0], sizes = [8, 32], strides = [1, 1]} : vector<8x128xf32> to vector<8x32xf32>
    %110 = vector.extract_strided_slice %108 {offsets = [0, 32], sizes = [8, 32], strides = [1, 1]} : vector<8x128xf32> to vector<8x32xf32>
    %111 = vector.extract_strided_slice %108 {offsets = [0, 64], sizes = [8, 32], strides = [1, 1]} : vector<8x128xf32> to vector<8x32xf32>
    %112 = vector.extract_strided_slice %108 {offsets = [0, 96], sizes = [8, 32], strides = [1, 1]} : vector<8x128xf32> to vector<8x32xf32>
    %113 = arith.mulf %110, %86 : vector<8x32xf32>
    %114 = arith.mulf %109, %112 : vector<8x32xf32>
    %115 = arith.addf %113, %114 : vector<8x32xf32>
    %116 = math.tanh %115 : vector<8x32xf32>
    %117 = arith.mulf %111, %116 : vector<8x32xf32>
    %118 = tpu.concatenate %107, %117 in 1 : vector<8x32xf32>, vector<8x32xf32> -> vector<8x64xf32>
    %119 = arith.truncf %118 : vector<8x64xf32> to vector<8x64xbf16>
    %cst_23 = arith.constant dense<0.000000e+00> : vector<8x256xf32>
    %120 = tpu.matmul %119, %36, %cst_23 {dimension_numbers = #tpu.dot_dimension_numbers<[1], [0], [0], [1], [0, 0, 1, 1], [], []>} : vector<8x64xbf16>, vector<64x256xbf16>, vector<8x256xf32> -> vector<8x256xf32>
    %121 = vector.extract_strided_slice %35 {offsets = [24, 0], sizes = [8, 256], strides = [1, 1]} : vector<72x256xf32> to vector<8x256xf32>
    %122 = arith.addf %121, %120 : vector<8x256xf32>
    %123 = arith.mulf %25, %122 : vector<8x256xf32>
    %124 = math.tanh %123 : vector<8x256xf32>
    %125 = arith.mulf %25, %124 : vector<8x256xf32>
    %126 = arith.addf %125, %28 : vector<8x256xf32>
    %127 = vector.extract_strided_slice %126 {offsets = [0, 0], sizes = [8, 128], strides = [1, 1]} : vector<8x256xf32> to vector<8x128xf32>
    %128 = vector.extract_strided_slice %127 {offsets = [0, 0], sizes = [8, 32], strides = [1, 1]} : vector<8x128xf32> to vector<8x32xf32>
    %129 = vector.extract_strided_slice %127 {offsets = [0, 32], sizes = [8, 32], strides = [1, 1]} : vector<8x128xf32> to vector<8x32xf32>
    %130 = vector.extract_strided_slice %127 {offsets = [0, 64], sizes = [8, 32], strides = [1, 1]} : vector<8x128xf32> to vector<8x32xf32>
    %131 = vector.extract_strided_slice %127 {offsets = [0, 96], sizes = [8, 32], strides = [1, 1]} : vector<8x128xf32> to vector<8x32xf32>
    %132 = arith.mulf %129, %105 : vector<8x32xf32>
    %133 = arith.mulf %128, %131 : vector<8x32xf32>
    %134 = arith.addf %132, %133 : vector<8x32xf32>
    %135 = math.tanh %134 : vector<8x32xf32>
    %136 = arith.mulf %130, %135 : vector<8x32xf32>
    %137 = vector.extract_strided_slice %126 {offsets = [0, 128], sizes = [8, 128], strides = [1, 1]} : vector<8x256xf32> to vector<8x128xf32>
    %138 = vector.extract_strided_slice %137 {offsets = [0, 0], sizes = [8, 32], strides = [1, 1]} : vector<8x128xf32> to vector<8x32xf32>
    %139 = vector.extract_strided_slice %137 {offsets = [0, 32], sizes = [8, 32], strides = [1, 1]} : vector<8x128xf32> to vector<8x32xf32>
    %140 = vector.extract_strided_slice %137 {offsets = [0, 64], sizes = [8, 32], strides = [1, 1]} : vector<8x128xf32> to vector<8x32xf32>
    %141 = vector.extract_strided_slice %137 {offsets = [0, 96], sizes = [8, 32], strides = [1, 1]} : vector<8x128xf32> to vector<8x32xf32>
    %142 = arith.mulf %139, %115 : vector<8x32xf32>
    %143 = arith.mulf %138, %141 : vector<8x32xf32>
    %144 = arith.addf %142, %143 : vector<8x32xf32>
    %145 = math.tanh %144 : vector<8x32xf32>
    %146 = arith.mulf %140, %145 : vector<8x32xf32>
    %147 = tpu.concatenate %136, %146 in 1 : vector<8x32xf32>, vector<8x32xf32> -> vector<8x64xf32>
    %148 = arith.truncf %147 : vector<8x64xf32> to vector<8x64xbf16>
    %cst_24 = arith.constant dense<0.000000e+00> : vector<8x256xf32>
    %149 = tpu.matmul %148, %36, %cst_24 {dimension_numbers = #tpu.dot_dimension_numbers<[1], [0], [0], [1], [0, 0, 1, 1], [], []>} : vector<8x64xbf16>, vector<64x256xbf16>, vector<8x256xf32> -> vector<8x256xf32>
    %150 = vector.extract_strided_slice %35 {offsets = [32, 0], sizes = [8, 256], strides = [1, 1]} : vector<72x256xf32> to vector<8x256xf32>
    %151 = arith.addf %150, %149 : vector<8x256xf32>
    %152 = arith.mulf %25, %151 : vector<8x256xf32>
    %153 = math.tanh %152 : vector<8x256xf32>
    %154 = arith.mulf %25, %153 : vector<8x256xf32>
    %155 = arith.addf %154, %28 : vector<8x256xf32>
    %156 = vector.extract_strided_slice %155 {offsets = [0, 0], sizes = [8, 128], strides = [1, 1]} : vector<8x256xf32> to vector<8x128xf32>
    %157 = vector.extract_strided_slice %156 {offsets = [0, 0], sizes = [8, 32], strides = [1, 1]} : vector<8x128xf32> to vector<8x32xf32>
    %158 = vector.extract_strided_slice %156 {offsets = [0, 32], sizes = [8, 32], strides = [1, 1]} : vector<8x128xf32> to vector<8x32xf32>
    %159 = vector.extract_strided_slice %156 {offsets = [0, 64], sizes = [8, 32], strides = [1, 1]} : vector<8x128xf32> to vector<8x32xf32>
    %160 = vector.extract_strided_slice %156 {offsets = [0, 96], sizes = [8, 32], strides = [1, 1]} : vector<8x128xf32> to vector<8x32xf32>
    %161 = arith.mulf %158, %134 : vector<8x32xf32>
    %162 = arith.mulf %157, %160 : vector<8x32xf32>
    %163 = arith.addf %161, %162 : vector<8x32xf32>
    %164 = math.tanh %163 : vector<8x32xf32>
    %165 = arith.mulf %159, %164 : vector<8x32xf32>
    %166 = vector.extract_strided_slice %155 {offsets = [0, 128], sizes = [8, 128], strides = [1, 1]} : vector<8x256xf32> to vector<8x128xf32>
    %167 = vector.extract_strided_slice %166 {offsets = [0, 0], sizes = [8, 32], strides = [1, 1]} : vector<8x128xf32> to vector<8x32xf32>
    %168 = vector.extract_strided_slice %166 {offsets = [0, 32], sizes = [8, 32], strides = [1, 1]} : vector<8x128xf32> to vector<8x32xf32>
    %169 = vector.extract_strided_slice %166 {offsets = [0, 64], sizes = [8, 32], strides = [1, 1]} : vector<8x128xf32> to vector<8x32xf32>
    %170 = vector.extract_strided_slice %166 {offsets = [0, 96], sizes = [8, 32], strides = [1, 1]} : vector<8x128xf32> to vector<8x32xf32>
    %171 = arith.mulf %168, %144 : vector<8x32xf32>
    %172 = arith.mulf %167, %170 : vector<8x32xf32>
    %173 = arith.addf %171, %172 : vector<8x32xf32>
    %174 = math.tanh %173 : vector<8x32xf32>
    %175 = arith.mulf %169, %174 : vector<8x32xf32>
    %176 = tpu.concatenate %165, %175 in 1 : vector<8x32xf32>, vector<8x32xf32> -> vector<8x64xf32>
    %177 = arith.truncf %176 : vector<8x64xf32> to vector<8x64xbf16>
    %cst_25 = arith.constant dense<0.000000e+00> : vector<8x256xf32>
    %178 = tpu.matmul %177, %36, %cst_25 {dimension_numbers = #tpu.dot_dimension_numbers<[1], [0], [0], [1], [0, 0, 1, 1], [], []>} : vector<8x64xbf16>, vector<64x256xbf16>, vector<8x256xf32> -> vector<8x256xf32>
    %179 = vector.extract_strided_slice %35 {offsets = [40, 0], sizes = [8, 256], strides = [1, 1]} : vector<72x256xf32> to vector<8x256xf32>
    %180 = arith.addf %179, %178 : vector<8x256xf32>
    %181 = arith.mulf %25, %180 : vector<8x256xf32>
    %182 = math.tanh %181 : vector<8x256xf32>
    %183 = arith.mulf %25, %182 : vector<8x256xf32>
    %184 = arith.addf %183, %28 : vector<8x256xf32>
    %185 = vector.extract_strided_slice %184 {offsets = [0, 0], sizes = [8, 128], strides = [1, 1]} : vector<8x256xf32> to vector<8x128xf32>
    %186 = vector.extract_strided_slice %185 {offsets = [0, 0], sizes = [8, 32], strides = [1, 1]} : vector<8x128xf32> to vector<8x32xf32>
    %187 = vector.extract_strided_slice %185 {offsets = [0, 32], sizes = [8, 32], strides = [1, 1]} : vector<8x128xf32> to vector<8x32xf32>
    %188 = vector.extract_strided_slice %185 {offsets = [0, 64], sizes = [8, 32], strides = [1, 1]} : vector<8x128xf32> to vector<8x32xf32>
    %189 = vector.extract_strided_slice %185 {offsets = [0, 96], sizes = [8, 32], strides = [1, 1]} : vector<8x128xf32> to vector<8x32xf32>
    %190 = arith.mulf %187, %163 : vector<8x32xf32>
    %191 = arith.mulf %186, %189 : vector<8x32xf32>
    %192 = arith.addf %190, %191 : vector<8x32xf32>
    %193 = math.tanh %192 : vector<8x32xf32>
    %194 = arith.mulf %188, %193 : vector<8x32xf32>
    %195 = vector.extract_strided_slice %184 {offsets = [0, 128], sizes = [8, 128], strides = [1, 1]} : vector<8x256xf32> to vector<8x128xf32>
    %196 = vector.extract_strided_slice %195 {offsets = [0, 0], sizes = [8, 32], strides = [1, 1]} : vector<8x128xf32> to vector<8x32xf32>
    %197 = vector.extract_strided_slice %195 {offsets = [0, 32], sizes = [8, 32], strides = [1, 1]} : vector<8x128xf32> to vector<8x32xf32>
    %198 = vector.extract_strided_slice %195 {offsets = [0, 64], sizes = [8, 32], strides = [1, 1]} : vector<8x128xf32> to vector<8x32xf32>
    %199 = vector.extract_strided_slice %195 {offsets = [0, 96], sizes = [8, 32], strides = [1, 1]} : vector<8x128xf32> to vector<8x32xf32>
    %200 = arith.mulf %197, %173 : vector<8x32xf32>
    %201 = arith.mulf %196, %199 : vector<8x32xf32>
    %202 = arith.addf %200, %201 : vector<8x32xf32>
    %203 = math.tanh %202 : vector<8x32xf32>
    %204 = arith.mulf %198, %203 : vector<8x32xf32>
    %205 = tpu.concatenate %194, %204 in 1 : vector<8x32xf32>, vector<8x32xf32> -> vector<8x64xf32>
    %206 = arith.truncf %205 : vector<8x64xf32> to vector<8x64xbf16>
    %cst_26 = arith.constant dense<0.000000e+00> : vector<8x256xf32>
    %207 = tpu.matmul %206, %36, %cst_26 {dimension_numbers = #tpu.dot_dimension_numbers<[1], [0], [0], [1], [0, 0, 1, 1], [], []>} : vector<8x64xbf16>, vector<64x256xbf16>, vector<8x256xf32> -> vector<8x256xf32>
    %208 = vector.extract_strided_slice %35 {offsets = [48, 0], sizes = [8, 256], strides = [1, 1]} : vector<72x256xf32> to vector<8x256xf32>
    %209 = arith.addf %208, %207 : vector<8x256xf32>
    %210 = arith.mulf %25, %209 : vector<8x256xf32>
    %211 = math.tanh %210 : vector<8x256xf32>
    %212 = arith.mulf %25, %211 : vector<8x256xf32>
    %213 = arith.addf %212, %28 : vector<8x256xf32>
    %214 = vector.extract_strided_slice %213 {offsets = [0, 0], sizes = [8, 128], strides = [1, 1]} : vector<8x256xf32> to vector<8x128xf32>
    %215 = vector.extract_strided_slice %214 {offsets = [0, 0], sizes = [8, 32], strides = [1, 1]} : vector<8x128xf32> to vector<8x32xf32>
    %216 = vector.extract_strided_slice %214 {offsets = [0, 32], sizes = [8, 32], strides = [1, 1]} : vector<8x128xf32> to vector<8x32xf32>
    %217 = vector.extract_strided_slice %214 {offsets = [0, 64], sizes = [8, 32], strides = [1, 1]} : vector<8x128xf32> to vector<8x32xf32>
    %218 = vector.extract_strided_slice %214 {offsets = [0, 96], sizes = [8, 32], strides = [1, 1]} : vector<8x128xf32> to vector<8x32xf32>
    %219 = arith.mulf %216, %192 : vector<8x32xf32>
    %220 = arith.mulf %215, %218 : vector<8x32xf32>
    %221 = arith.addf %219, %220 : vector<8x32xf32>
    %222 = math.tanh %221 : vector<8x32xf32>
    %223 = arith.mulf %217, %222 : vector<8x32xf32>
    %224 = vector.extract_strided_slice %213 {offsets = [0, 128], sizes = [8, 128], strides = [1, 1]} : vector<8x256xf32> to vector<8x128xf32>
    %225 = vector.extract_strided_slice %224 {offsets = [0, 0], sizes = [8, 32], strides = [1, 1]} : vector<8x128xf32> to vector<8x32xf32>
    %226 = vector.extract_strided_slice %224 {offsets = [0, 32], sizes = [8, 32], strides = [1, 1]} : vector<8x128xf32> to vector<8x32xf32>
    %227 = vector.extract_strided_slice %224 {offsets = [0, 64], sizes = [8, 32], strides = [1, 1]} : vector<8x128xf32> to vector<8x32xf32>
    %228 = vector.extract_strided_slice %224 {offsets = [0, 96], sizes = [8, 32], strides = [1, 1]} : vector<8x128xf32> to vector<8x32xf32>
    %229 = arith.mulf %226, %202 : vector<8x32xf32>
    %230 = arith.mulf %225, %228 : vector<8x32xf32>
    %231 = arith.addf %229, %230 : vector<8x32xf32>
    %232 = math.tanh %231 : vector<8x32xf32>
    %233 = arith.mulf %227, %232 : vector<8x32xf32>
    %234 = tpu.concatenate %223, %233 in 1 : vector<8x32xf32>, vector<8x32xf32> -> vector<8x64xf32>
    %235 = arith.truncf %234 : vector<8x64xf32> to vector<8x64xbf16>
    %cst_27 = arith.constant dense<0.000000e+00> : vector<8x256xf32>
    %236 = tpu.matmul %235, %36, %cst_27 {dimension_numbers = #tpu.dot_dimension_numbers<[1], [0], [0], [1], [0, 0, 1, 1], [], []>} : vector<8x64xbf16>, vector<64x256xbf16>, vector<8x256xf32> -> vector<8x256xf32>
    %237 = vector.extract_strided_slice %35 {offsets = [56, 0], sizes = [8, 256], strides = [1, 1]} : vector<72x256xf32> to vector<8x256xf32>
    %238 = arith.addf %237, %236 : vector<8x256xf32>
    %239 = arith.mulf %25, %238 : vector<8x256xf32>
    %240 = math.tanh %239 : vector<8x256xf32>
    %241 = arith.mulf %25, %240 : vector<8x256xf32>
    %242 = arith.addf %241, %28 : vector<8x256xf32>
    %243 = vector.extract_strided_slice %242 {offsets = [0, 0], sizes = [8, 128], strides = [1, 1]} : vector<8x256xf32> to vector<8x128xf32>
    %244 = vector.extract_strided_slice %243 {offsets = [0, 0], sizes = [8, 32], strides = [1, 1]} : vector<8x128xf32> to vector<8x32xf32>
    %245 = vector.extract_strided_slice %243 {offsets = [0, 32], sizes = [8, 32], strides = [1, 1]} : vector<8x128xf32> to vector<8x32xf32>
    %246 = vector.extract_strided_slice %243 {offsets = [0, 64], sizes = [8, 32], strides = [1, 1]} : vector<8x128xf32> to vector<8x32xf32>
    %247 = vector.extract_strided_slice %243 {offsets = [0, 96], sizes = [8, 32], strides = [1, 1]} : vector<8x128xf32> to vector<8x32xf32>
    %248 = arith.mulf %245, %221 : vector<8x32xf32>
    %249 = arith.mulf %244, %247 : vector<8x32xf32>
    %250 = arith.addf %248, %249 : vector<8x32xf32>
    %251 = math.tanh %250 : vector<8x32xf32>
    %252 = arith.mulf %246, %251 : vector<8x32xf32>
    %253 = vector.extract_strided_slice %242 {offsets = [0, 128], sizes = [8, 128], strides = [1, 1]} : vector<8x256xf32> to vector<8x128xf32>
    %254 = vector.extract_strided_slice %253 {offsets = [0, 0], sizes = [8, 32], strides = [1, 1]} : vector<8x128xf32> to vector<8x32xf32>
    %255 = vector.extract_strided_slice %253 {offsets = [0, 32], sizes = [8, 32], strides = [1, 1]} : vector<8x128xf32> to vector<8x32xf32>
    %256 = vector.extract_strided_slice %253 {offsets = [0, 64], sizes = [8, 32], strides = [1, 1]} : vector<8x128xf32> to vector<8x32xf32>
    %257 = vector.extract_strided_slice %253 {offsets = [0, 96], sizes = [8, 32], strides = [1, 1]} : vector<8x128xf32> to vector<8x32xf32>
    %258 = arith.mulf %255, %231 : vector<8x32xf32>
    %259 = arith.mulf %254, %257 : vector<8x32xf32>
    %260 = arith.addf %258, %259 : vector<8x32xf32>
    %261 = math.tanh %260 : vector<8x32xf32>
    %262 = arith.mulf %256, %261 : vector<8x32xf32>
    %263 = tpu.concatenate %252, %262 in 1 : vector<8x32xf32>, vector<8x32xf32> -> vector<8x64xf32>
    %264 = arith.truncf %263 : vector<8x64xf32> to vector<8x64xbf16>
    %cst_28 = arith.constant dense<0.000000e+00> : vector<8x256xf32>
    %265 = tpu.matmul %264, %36, %cst_28 {dimension_numbers = #tpu.dot_dimension_numbers<[1], [0], [0], [1], [0, 0, 1, 1], [], []>} : vector<8x64xbf16>, vector<64x256xbf16>, vector<8x256xf32> -> vector<8x256xf32>
    %266 = vector.extract_strided_slice %35 {offsets = [64, 0], sizes = [8, 256], strides = [1, 1]} : vector<72x256xf32> to vector<8x256xf32>
    %267 = arith.addf %266, %265 : vector<8x256xf32>
    %268 = arith.mulf %25, %267 : vector<8x256xf32>
    %269 = math.tanh %268 : vector<8x256xf32>
    %270 = arith.mulf %25, %269 : vector<8x256xf32>
    %271 = arith.addf %270, %28 : vector<8x256xf32>
    %272 = vector.extract_strided_slice %271 {offsets = [0, 128], sizes = [8, 128], strides = [1, 1]} : vector<8x256xf32> to vector<8x128xf32>
    %273 = vector.extract_strided_slice %272 {offsets = [0, 0], sizes = [8, 32], strides = [1, 1]} : vector<8x128xf32> to vector<8x32xf32>
    %274 = vector.extract_strided_slice %272 {offsets = [0, 32], sizes = [8, 32], strides = [1, 1]} : vector<8x128xf32> to vector<8x32xf32>
    %275 = vector.extract_strided_slice %272 {offsets = [0, 64], sizes = [8, 32], strides = [1, 1]} : vector<8x128xf32> to vector<8x32xf32>
    %276 = vector.extract_strided_slice %272 {offsets = [0, 96], sizes = [8, 32], strides = [1, 1]} : vector<8x128xf32> to vector<8x32xf32>
    %277 = arith.mulf %274, %260 : vector<8x32xf32>
    %278 = arith.mulf %273, %276 : vector<8x32xf32>
    %279 = arith.addf %277, %278 : vector<8x32xf32>
    %280 = math.tanh %279 : vector<8x32xf32>
    %281 = arith.mulf %275, %280 : vector<8x32xf32>
    %282 = arith.truncf %281 : vector<8x32xf32> to vector<8x32xbf16>
    %c0_i32_29 = arith.constant 0 : i32
    %283 = tpu.memref_slice %arg11[%c0_i32_29] : memref<2x!tpu.dma_semaphore, #tpu.memory_space<semaphore_mem>> -> memref<1x!tpu.dma_semaphore, #tpu.memory_space<semaphore_mem>>
    %284 = tpu.memref_squeeze %283 : memref<1x!tpu.dma_semaphore, #tpu.memory_space<semaphore_mem>> -> memref<!tpu.dma_semaphore, #tpu.memory_space<semaphore_mem>>
    tpu.wait_dma2 semaphore(%284 : memref<!tpu.dma_semaphore, #tpu.memory_space<semaphore_mem>>) src(%arg4 : memref<32x1024xbf16, #tpu.memory_space<any>>) dst(%arg9 : memref<32x1024xbf16, #tpu.memory_space<vmem>>)
    %c0_30 = arith.constant 0 : index
    %c0_31 = arith.constant 0 : index
    %285 = vector.load %arg9[%c0_30, %c0_31] : memref<32x1024xbf16, #tpu.memory_space<vmem>>, vector<32x1024xbf16>
    %cst_32 = arith.constant dense<0.000000e+00> : vector<8x1024xf32>
    %286 = tpu.matmul %282, %285, %cst_32 {dimension_numbers = #tpu.dot_dimension_numbers<[1], [0], [0], [1], [0, 0, 1, 1], [], []>} : vector<8x32xbf16>, vector<32x1024xbf16>, vector<8x1024xf32> -> vector<8x1024xf32>
    %c0_33 = arith.constant 0 : index
    %c0_34 = arith.constant 0 : index
    %287 = vector.load %arg5[%c0_33, %c0_34] : memref<1x1024xf32, #tpu.memory_space<vmem>>, vector<1x1024xf32>
    %288 = vector.broadcast %287 : vector<1x1024xf32> to vector<8x1024xf32>
    %289 = arith.addf %286, %288 : vector<8x1024xf32>
    %cst_35 = arith.constant 0.000000e+00 : f32
    %290 = vector.broadcast %cst_35 : f32 to vector<8x1024xf32>
    %291 = arith.maximumf %289, %290 : vector<8x1024xf32>
    %c1_i32_36 = arith.constant 1 : i32
    %292 = tpu.memref_slice %arg11[%c1_i32_36] : memref<2x!tpu.dma_semaphore, #tpu.memory_space<semaphore_mem>> -> memref<1x!tpu.dma_semaphore, #tpu.memory_space<semaphore_mem>>
    %293 = tpu.memref_squeeze %292 : memref<1x!tpu.dma_semaphore, #tpu.memory_space<semaphore_mem>> -> memref<!tpu.dma_semaphore, #tpu.memory_space<semaphore_mem>>
    tpu.wait_dma2 semaphore(%293 : memref<!tpu.dma_semaphore, #tpu.memory_space<semaphore_mem>>) src(%arg6 : memref<1024x128xbf16, #tpu.memory_space<any>>) dst(%arg10 : memref<1024x128xbf16, #tpu.memory_space<vmem>>)
    %294 = arith.truncf %291 : vector<8x1024xf32> to vector<8x1024xbf16>
    %c0_37 = arith.constant 0 : index
    %c0_38 = arith.constant 0 : index
    %295 = vector.load %arg10[%c0_37, %c0_38] : memref<1024x128xbf16, #tpu.memory_space<vmem>>, vector<1024x128xbf16>
    %cst_39 = arith.constant dense<0.000000e+00> : vector<8x128xf32>
    %296 = tpu.matmul %294, %295, %cst_39 {dimension_numbers = #tpu.dot_dimension_numbers<[1], [0], [0], [1], [0, 0, 1, 1], [], []>} : vector<8x1024xbf16>, vector<1024x128xbf16>, vector<8x128xf32> -> vector<8x128xf32>
    %c0_40 = arith.constant 0 : index
    %c0_41 = arith.constant 0 : index
    %297 = vector.load %arg7[%c0_40, %c0_41] : memref<1x128xf32, #tpu.memory_space<vmem>>, vector<1x128xf32>
    %298 = vector.broadcast %297 : vector<1x128xf32> to vector<8x128xf32>
    %299 = arith.addf %296, %298 : vector<8x128xf32>
    %c0_42 = arith.constant 0 : index
    %c0_43 = arith.constant 0 : index
    %300 = vector.load %arg8[%c0_42, %c0_43] : memref<8x128xf32, #tpu.memory_space<vmem>>, vector<8x128xf32>
    tpu.vector_store %arg8[%c0_42, %c0_43], %299 {strides = array<i32>} : memref<8x128xf32, #tpu.memory_space<vmem>>, vector<8x128xf32>,
    return
  }
}

</mosaic_0001>

<llo_original>
// kernel: lstm_model_forward.1
$region0: #{lstm_model_forward.1}
  #allocation0 [shape = 'u32[]', space=smem, size = 0x4, offset = 0x4, fixed_abs, tag = 'smem constant byte address 0x4 - core index']
  #allocation1 [shape = 'u32[144,128]{1,0:T(1,128)}', space=vmem, size = 0x12000, scoped, tag = 'internal scratch']
  #allocation2 [shape = 'bf16[32,1024]{1,0:T(16,128)(2,1)}', space=vmem, size = 0x10000, scoped, tag = 'scratch operand']
  #allocation3 [shape = 'bf16[1024,128]{1,0:T(16,128)(2,1)}', space=vmem, size = 0x40000, scoped, tag = 'scratch operand']
  #allocation4 [shape = 's32[2]{0}', space=sflag, size = 0x8, scoped, tag = 'scratch operand']
  #allocation12 [shape = 's32[]', space=sflag, size = 0x4, offset = 0, fixed_abs, tag = 'sflag constant byte address 0x0 - dummy sync flag']
  #allocation13 [shape = 's32[]', space=sflag, size = 0x4, offset = 0, fixed_abs, tag = 'sflag constant byte address 0x0 - dummy sync flag']
  #allocation14 [shape = 's32[]', space=sflag, size = 0x4, offset = 0, fixed_abs, tag = 'sflag constant byte address 0x0 - dummy sync flag']
  #allocation15 [shape = 'u32[]', space=smem, size = 0x4, offset = 0x44, fixed_abs, tag = 'smem constant byte address 0x44 - assertion arg 0']
  #allocation16 [shape = 'u32[]', space=smem, size = 0x4, offset = 0x48, fixed_abs, tag = 'smem constant byte address 0x48 - assertion arg 1']
  %s0 = inlined_call_operand.vmem [shape: f32[72,4], index: 0, kind: input, shape index: {}]
  %s1 = inlined_call_operand.hbm [shape: bf16[4,256], index: 1, kind: input, shape index: {}]
  %s2 = inlined_call_operand.vmem [shape: f32[1,256], index: 2, kind: input, shape index: {}]
  %s3 = inlined_call_operand.hbm [shape: bf16[64,256], index: 3, kind: input, shape index: {}]
  %s4 = inlined_call_operand.vmem [shape: bf16[32,1024], index: 4, kind: input, shape index: {}]
  %s5 = inlined_call_operand.hbm [shape: f32[1,1024], index: 5, kind: input, shape index: {}]
  %s6 = inlined_call_operand.hbm [shape: bf16[1024,128], index: 6, kind: input, shape index: {}]
  %s7 = inlined_call_operand.hbm [shape: f32[1,128], index: 7, kind: input, shape index: {}]
  %s8 = inlined_call_operand.vmem [shape: f32[8,128], index: 8, kind: output, shape index: {}]
  %s9 = sld [smem:[#allocation0]]
  $region91: #{lstm_model_forward.1} parent=0
    _
  %s11 = ssub.s32 1, %s9
  %s12 = scalar_select 0, %s11, %s9
  $region1: #{lstm_model_forward.1} parent=0
    #allocation5 [shape = 'u8[2048]{0}', space=vmem, size = 0x800, scoped, tag = 'input window, operand 1, single buffered']
    #allocation6 [shape = 's32[1]{0}', space=sflag, size = 0x4, scoped, tag = 'scoped memory for lstm_model_forward.1']
    #allocation7 [shape = 'u8[32768]{0}', space=vmem, size = 0x8000, scoped, tag = 'input window, operand 3, single buffered']
    #allocation8 [shape = 's32[1]{0}', space=sflag, size = 0x4, scoped, tag = 'scoped memory for lstm_model_forward.1']
    #allocation9 [shape = 'u8[4096]{0}', space=vmem, size = 0x1000, scoped, tag = 'input window, operand 5, single buffered']
    #allocation10 [shape = 'u8[512]{0}', space=vmem, size = 0x400, scoped, tag = 'input window, operand 7, single buffered']
    #allocation11 [shape = 's32[1]{0}', space=sflag, size = 0x4, scoped, tag = 'scoped memory for lstm_model_forward.1']
    %13 = vsyncpa [#allocation6], 0
    %14 = vsyncpa [#allocation8], 0
    %15 = vsyncpa [#allocation11], 0
    // Predicated region
    $region2: #{lstm_model_forward.1} parent=1 // pred_check
      _
    $region3: #{lstm_model_forward.1} parent=1 // pred_check_branch
      %17 = sbr.rel (0) target = $region5
    $region4: #{lstm_model_forward.1} parent=1 // pred_region
      _
    $region5: #{lstm_model_forward.1} parent=1 // pred_fallthru
      _
    // Predicated region
    $region6: #{lstm_model_forward.1} parent=1 // pred_check
      _
    $region7: #{lstm_model_forward.1} parent=1 // pred_check_branch
      %19 = sbr.rel (0) target = $region9
    $region8: #{lstm_model_forward.1} parent=1 // pred_region
      %s21 = ssub.s32 64, 64
      %22 = vsyncadd [#allocation6], %s21
      %s24 = sshll.u32 [#allocation5], 4
      %s25 = int_to_ptr.vmem [resolvable:$true] %s24
      %27 = dma.hbm_to_vmem [thread:$0]  %s1, 64, %s25, [#allocation6]
    $region9: #{lstm_model_forward.1} parent=1 // pred_fallthru
      _
    // Predicated region
    $region10: #{lstm_model_forward.1} parent=1 // pred_check
      _
    $region11: #{lstm_model_forward.1} parent=1 // pred_check_branch
      %29 = sbr.rel (0) target = $region13
    $region12: #{lstm_model_forward.1} parent=1 // pred_region
      _
    $region13: #{lstm_model_forward.1} parent=1 // pred_fallthru
      _
    // Predicated region
    $region14: #{lstm_model_forward.1} parent=1 // pred_check
      _
    $region15: #{lstm_model_forward.1} parent=1 // pred_check_branch
      %31 = sbr.rel (0) target = $region17
    $region16: #{lstm_model_forward.1} parent=1 // pred_region
      %s33 = ssub.s32 1024, 1024
      %34 = vsyncadd [#allocation8], %s33
      %s35 = sshll.u32 [#allocation7], 4
      %s36 = int_to_ptr.vmem [resolvable:$true] %s35
      %41 = dma.hbm_to_vmem [thread:$0]  %s3, 1024, %s36, [#allocation8], 128, 128, 8
    $region17: #{lstm_model_forward.1} parent=1 // pred_fallthru
      _
    // Predicated region
    $region18: #{lstm_model_forward.1} parent=1 // pred_check
      _
    $region19: #{lstm_model_forward.1} parent=1 // pred_check_branch
      %43 = sbr.rel (0) target = $region21
    $region20: #{lstm_model_forward.1} parent=1 // pred_region
      %s45 = ssub.s32 128, 128
      %46 = vsyncadd [#allocation8], %s45
      %s48 = sshll.u32 [#allocation9], 4
      %s49 = int_to_ptr.vmem [resolvable:$true] %s48
      %51 = dma.hbm_to_vmem [thread:$0]  %s5, 128, %s49, [#allocation8]
    $region21: #{lstm_model_forward.1} parent=1 // pred_fallthru
      _
    // Predicated region
    $region22: #{lstm_model_forward.1} parent=1 // pred_check
      _
    $region23: #{lstm_model_forward.1} parent=1 // pred_check_branch
      %53 = sbr.rel (0) target = $region25
    $region24: #{lstm_model_forward.1} parent=1 // pred_region
      %s55 = ssub.s32 16, 16
      %56 = vsyncadd [#allocation11], %s55
      %s58 = sshll.u32 [#allocation10], 4
      %s59 = int_to_ptr.vmem [resolvable:$true] %s58
      %61 = dma.hbm_to_vmem [thread:$0]  %s7, 16, %s59, [#allocation11]
    $region25: #{lstm_model_forward.1} parent=1 // pred_fallthru
      _
    // Predicated region
    $region26: #{lstm_model_forward.1} parent=1 // pred_check
      _
    $region27: #{lstm_model_forward.1} parent=1 // pred_check_branch
      %63 = sbr.rel (0) target = $region29
    $region28: #{lstm_model_forward.1} parent=1 // pred_region
      %64 = dma.done [#allocation6], 64
    $region29: #{lstm_model_forward.1} parent=1 // pred_fallthru
      _
    // Predicated region
    $region30: #{lstm_model_forward.1} parent=1 // pred_check
      _
    $region31: #{lstm_model_forward.1} parent=1 // pred_check_branch
      %66 = sbr.rel (0) target = $region33
    $region32: #{lstm_model_forward.1} parent=1 // pred_region
      %67 = dma.done [#allocation8], 1024
    $region33: #{lstm_model_forward.1} parent=1 // pred_fallthru
      _
    // Predicated region
    $region34: #{lstm_model_forward.1} parent=1 // pred_check
      _
    $region35: #{lstm_model_forward.1} parent=1 // pred_check_branch
      %69 = sbr.rel (0) target = $region37
    $region36: #{lstm_model_forward.1} parent=1 // pred_region
      %70 = dma.done [#allocation8], 128
    $region37: #{lstm_model_forward.1} parent=1 // pred_fallthru
      _
    // Predicated region
    $region38: #{lstm_model_forward.1} parent=1 // pred_check
      _
    $region39: #{lstm_model_forward.1} parent=1 // pred_check_branch
      %72 = sbr.rel (0) target = $region41
    $region40: #{lstm_model_forward.1} parent=1 // pred_region
      %73 = dma.done [#allocation11], 16
    $region41: #{lstm_model_forward.1} parent=1 // pred_fallthru
      _
    %p76 = scmp.lt.u32.totalorder 4, 8
    %p77 = pneg %p76
    // Predicated region
    $region42: #{lstm_model_forward.1} parent=1 // pred_check
      _
    $region43: #{lstm_model_forward.1} parent=1 // pred_check_branch
      %79 = sbr.rel (%p76) target = $region45
    $region44: #{lstm_model_forward.1} parent=1 // pred_region
      %s156 = sand.u32 4, 7
      %p157 = scmp.eq.s32.totalorder %s156, 0
      %p158 = pneg %p157
      // Predicated region
      $region57: #{lstm_model_forward.1} parent=44 // pred_check
        _
      $region58: #{lstm_model_forward.1} parent=44 // pred_check_branch
        %160 = sbr.rel (%p157) target = $region60
      $region59: #{lstm_model_forward.1} parent=44 // pred_region
        %s161 = sand.u32 4, 7
        %s162 = ssub.s32 4, %s161
        %s163 = scalar_lea.vmem %s4, %s162
        %s164 = ssub.s32 4, %s161
        %s165 = scalar_lea.vmem [#allocation2], %s164
        loop: start=0, step=1, limit=1
        $region61: #{lstm_model_forward.1} parent=59 // loop_pre_header
          _
        $region62: #{lstm_model_forward.1} parent=59 // loop_header
          %s167 = sphi 0, %s171
          %p168 = scmp.ge.s32.totalorder %s167, 1
          %s172 = sphi %s4, %s4
          %s173 = sphi [#allocation2], [#allocation2]
        $region63: #{lstm_model_forward.1} parent=59 // loop_header_branch
          %170 = sbr.rel (%p168) target = $region67
        $region64: #{lstm_model_forward.1} parent=59 // loop_body
          _
        $region65: #{lstm_model_forward.1} parent=59 // loop_footer
          %s171 = sadd.s32 1, %s167
        $region66: #{lstm_model_forward.1} parent=59 // loop_footer_branch
          %166 = sbr.rel target = $region62
        $region67: #{lstm_model_forward.1} parent=59 // loop_exit
          _
        %s174 = sshllo.u32 0, %s161
        loop: start=0, step=1, limit=1
        $region68: #{lstm_model_forward.1} parent=59 // loop_pre_header
          _
        $region69: #{lstm_model_forward.1} parent=59 // loop_header
          %s176 = sphi 0, %s180
          %p177 = scmp.ge.s32.totalorder %s176, 1
          %s181 = sphi %s163, %s163
          %s182 = sphi %s165, %s165
        $region70: #{lstm_model_forward.1} parent=59 // loop_header_branch
          %179 = sbr.rel (%p177) target = $region74
        $region71: #{lstm_model_forward.1} parent=59 // loop_body
          %v183 = vld [vmem:[%s181] sm:%s174]
          %184 = vst [vmem:[%s182] sm:%s174] %v183
          %v185 = vld [vmem:[%s181 + $0x20] sm:%s174]
          %186 = vst [vmem:[%s182 + $0x4] sm:%s174] %v185
          %v187 = vld [vmem:[%s181 + $0x4] sm:%s174]
          %188 = vst [vmem:[%s182 + $0x8] sm:%s174] %v187
          %v189 = vld [vmem:[%s181 + $0x24] sm:%s174]
          %190 = vst [vmem:[%s182 + $0xc] sm:%s174] %v189
          %v191 = vld [vmem:[%s181 + $0x8] sm:%s174]
          %192 = vst [vmem:[%s182 + $0x10] sm:%s174] %v191
          %v193 = vld [vmem:[%s181 + $0x28] sm:%s174]
          %194 = vst [vmem:[%s182 + $0x14] sm:%s174] %v193
          %v195 = vld [vmem:[%s181 + $0xc] sm:%s174]
          %196 = vst [vmem:[%s182 + $0x18] sm:%s174] %v195
          %v197 = vld [vmem:[%s181 + $0x2c] sm:%s174]
          %198 = vst [vmem:[%s182 + $0x1c] sm:%s174] %v197
          %v199 = vld [vmem:[%s181 + $0x10] sm:%s174]
          %200 = vst [vmem:[%s182 + $0x20] sm:%s174] %v199
          %v201 = vld [vmem:[%s181 + $0x30] sm:%s174]
          %202 = vst [vmem:[%s182 + $0x24] sm:%s174] %v201
          %v203 = vld [vmem:[%s181 + $0x14] sm:%s174]
          %204 = vst [vmem:[%s182 + $0x28] sm:%s174] %v203
          %v205 = vld [vmem:[%s181 + $0x34] sm:%s174]
          %206 = vst [vmem:[%s182 + $0x2c] sm:%s174] %v205
          %v207 = vld [vmem:[%s181 + $0x18] sm:%s174]
          %208 = vst [vmem:[%s182 + $0x30] sm:%s174] %v207
          %v209 = vld [vmem:[%s181 + $0x38] sm:%s174]
          %210 = vst [vmem:[%s182 + $0x34] sm:%s174] %v209
          %v211 = vld [vmem:[%s181 + $0x1c] sm:%s174]
          %212 = vst [vmem:[%s182 + $0x38] sm:%s174] %v211
          %v213 = vld [vmem:[%s181 + $0x3c] sm:%s174]
          %214 = vst [vmem:[%s182 + $0x3c] sm:%s174] %v213
          %v215 = vld [vmem:[%s181 + $0x40] sm:%s174]
          %216 = vst [vmem:[%s182 + $0x40] sm:%s174] %v215
          %v217 = vld [vmem:[%s181 + $0x60] sm:%s174]
          %218 = vst [vmem:[%s182 + $0x44] sm:%s174] %v217
          %v219 = vld [vmem:[%s181 + $0x44] sm:%s174]
          %220 = vst [vmem:[%s182 + $0x48] sm:%s174] %v219
          %v221 = vld [vmem:[%s181 + $0x64] sm:%s174]
          %222 = vst [vmem:[%s182 + $0x4c] sm:%s174] %v221
          %v223 = vld [vmem:[%s181 + $0x48] sm:%s174]
          %224 = vst [vmem:[%s182 + $0x50] sm:%s174] %v223
          %v225 = vld [vmem:[%s181 + $0x68] sm:%s174]
          %226 = vst [vmem:[%s182 + $0x54] sm:%s174] %v225
          %v227 = vld [vmem:[%s181 + $0x4c] sm:%s174]
          %228 = vst [vmem:[%s182 + $0x58] sm:%s174] %v227
          %v229 = vld [vmem:[%s181 + $0x6c] sm:%s174]
          %230 = vst [vmem:[%s182 + $0x5c] sm:%s174] %v229
          %v231 = vld [vmem:[%s181 + $0x50] sm:%s174]
          %232 = vst [vmem:[%s182 + $0x60] sm:%s174] %v231
          %v233 = vld [vmem:[%s181 + $0x70] sm:%s174]
          %234 = vst [vmem:[%s182 + $0x64] sm:%s174] %v233
          %v235 = vld [vmem:[%s181 + $0x54] sm:%s174]
          %236 = vst [vmem:[%s182 + $0x68] sm:%s174] %v235
          %v237 = vld [vmem:[%s181 + $0x74] sm:%s174]
          %238 = vst [vmem:[%s182 + $0x6c] sm:%s174] %v237
          %v239 = vld [vmem:[%s181 + $0x58] sm:%s174]
          %240 = vst [vmem:[%s182 + $0x70] sm:%s174] %v239
          %v241 = vld [vmem:[%s181 + $0x78] sm:%s174]
          %242 = vst [vmem:[%s182 + $0x74] sm:%s174] %v241
          %v243 = vld [vmem:[%s181 + $0x5c] sm:%s174]
          %244 = vst [vmem:[%s182 + $0x78] sm:%s174] %v243
          %v245 = vld [vmem:[%s181 + $0x7c] sm:%s174]
          %246 = vst [vmem:[%s182 + $0x7c] sm:%s174] %v245
        $region72: #{lstm_model_forward.1} parent=59 // loop_footer
          %s180 = sadd.s32 1, %s176
        $region73: #{lstm_model_forward.1} parent=59 // loop_footer_branch
          %175 = sbr.rel target = $region69
        $region74: #{lstm_model_forward.1} parent=59 // loop_exit
          _
      $region60: #{lstm_model_forward.1} parent=44 // pred_fallthru
        _
    $region45: #{lstm_model_forward.1} parent=1 // pred_fallthru
      _
    // Predicated region
    $region46: #{lstm_model_forward.1} parent=1 // pred_check
      %p80 = pneg %p76
    $region47: #{lstm_model_forward.1} parent=1 // pred_check_branch
      %82 = sbr.rel (%p80) target = $region49
    $region48: #{lstm_model_forward.1} parent=1 // pred_region
      %s83 = sshllo.u32 0, 4
      loop: start=0, step=1, limit=1
      $region50: #{lstm_model_forward.1} parent=48 // loop_pre_header
        _
      $region51: #{lstm_model_forward.1} parent=48 // loop_header
        %s85 = sphi 0, %s89
        %p86 = scmp.ge.s32.totalorder %s85, 1
        %s90 = sphi %s4, %s4
        %s91 = sphi [#allocation2], [#allocation2]
      $region52: #{lstm_model_forward.1} parent=48 // loop_header_branch
        %88 = sbr.rel (%p86) target = $region56
      $region53: #{lstm_model_forward.1} parent=48 // loop_body
        %v92 = vld [vmem:[%s90] sm:%s83]
        %93 = vst [vmem:[%s91] sm:%s83] %v92
        %v94 = vld [vmem:[%s90 + $0x20] sm:%s83]
        %95 = vst [vmem:[%s91 + $0x4] sm:%s83] %v94
        %v96 = vld [vmem:[%s90 + $0x4] sm:%s83]
        %97 = vst [vmem:[%s91 + $0x8] sm:%s83] %v96
        %v98 = vld [vmem:[%s90 + $0x24] sm:%s83]
        %99 = vst [vmem:[%s91 + $0xc] sm:%s83] %v98
        %v100 = vld [vmem:[%s90 + $0x8] sm:%s83]
        %101 = vst [vmem:[%s91 + $0x10] sm:%s83] %v100
        %v102 = vld [vmem:[%s90 + $0x28] sm:%s83]
        %103 = vst [vmem:[%s91 + $0x14] sm:%s83] %v102
        %v104 = vld [vmem:[%s90 + $0xc] sm:%s83]
        %105 = vst [vmem:[%s91 + $0x18] sm:%s83] %v104
        %v106 = vld [vmem:[%s90 + $0x2c] sm:%s83]
        %107 = vst [vmem:[%s91 + $0x1c] sm:%s83] %v106
        %v108 = vld [vmem:[%s90 + $0x10] sm:%s83]
        %109 = vst [vmem:[%s91 + $0x20] sm:%s83] %v108
        %v110 = vld [vmem:[%s90 + $0x30] sm:%s83]
        %111 = vst [vmem:[%s91 + $0x24] sm:%s83] %v110
        %v112 = vld [vmem:[%s90 + $0x14] sm:%s83]
        %113 = vst [vmem:[%s91 + $0x28] sm:%s83] %v112
        %v114 = vld [vmem:[%s90 + $0x34] sm:%s83]
        %115 = vst [vmem:[%s91 + $0x2c] sm:%s83] %v114
        %v116 = vld [vmem:[%s90 + $0x18] sm:%s83]
        %117 = vst [vmem:[%s91 + $0x30] sm:%s83] %v116
        %v118 = vld [vmem:[%s90 + $0x38] sm:%s83]
        %119 = vst [vmem:[%s91 + $0x34] sm:%s83] %v118
        %v120 = vld [vmem:[%s90 + $0x1c] sm:%s83]
        %121 = vst [vmem:[%s91 + $0x38] sm:%s83] %v120
        %v122 = vld [vmem:[%s90 + $0x3c] sm:%s83]
        %123 = vst [vmem:[%s91 + $0x3c] sm:%s83] %v122
        %v124 = vld [vmem:[%s90 + $0x40] sm:%s83]
        %125 = vst [vmem:[%s91 + $0x40] sm:%s83] %v124
        %v126 = vld [vmem:[%s90 + $0x60] sm:%s83]
        %127 = vst [vmem:[%s91 + $0x44] sm:%s83] %v126
        %v128 = vld [vmem:[%s90 + $0x44] sm:%s83]
        %129 = vst [vmem:[%s91 + $0x48] sm:%s83] %v128
        %v130 = vld [vmem:[%s90 + $0x64] sm:%s83]
        %131 = vst [vmem:[%s91 + $0x4c] sm:%s83] %v130
        %v132 = vld [vmem:[%s90 + $0x48] sm:%s83]
        %133 = vst [vmem:[%s91 + $0x50] sm:%s83] %v132
        %v134 = vld [vmem:[%s90 + $0x68] sm:%s83]
        %135 = vst [vmem:[%s91 + $0x54] sm:%s83] %v134
        %v136 = vld [vmem:[%s90 + $0x4c] sm:%s83]
        %137 = vst [vmem:[%s91 + $0x58] sm:%s83] %v136
        %v138 = vld [vmem:[%s90 + $0x6c] sm:%s83]
        %139 = vst [vmem:[%s91 + $0x5c] sm:%s83] %v138
        %v140 = vld [vmem:[%s90 + $0x50] sm:%s83]
        %141 = vst [vmem:[%s91 + $0x60] sm:%s83] %v140
        %v142 = vld [vmem:[%s90 + $0x70] sm:%s83]
        %143 = vst [vmem:[%s91 + $0x64] sm:%s83] %v142
        %v144 = vld [vmem:[%s90 + $0x54] sm:%s83]
        %145 = vst [vmem:[%s91 + $0x68] sm:%s83] %v144
        %v146 = vld [vmem:[%s90 + $0x74] sm:%s83]
        %147 = vst [vmem:[%s91 + $0x6c] sm:%s83] %v146
        %v148 = vld [vmem:[%s90 + $0x58] sm:%s83]
        %149 = vst [vmem:[%s91 + $0x70] sm:%s83] %v148
        %v150 = vld [vmem:[%s90 + $0x78] sm:%s83]
        %151 = vst [vmem:[%s91 + $0x74] sm:%s83] %v150
        %v152 = vld [vmem:[%s90 + $0x5c] sm:%s83]
        %153 = vst [vmem:[%s91 + $0x78] sm:%s83] %v152
        %v154 = vld [vmem:[%s90 + $0x7c] sm:%s83]
        %155 = vst [vmem:[%s91 + $0x7c] sm:%s83] %v154
      $region54: #{lstm_model_forward.1} parent=48 // loop_footer
        %s89 = sadd.s32 1, %s85
      $region55: #{lstm_model_forward.1} parent=48 // loop_footer_branch
        %84 = sbr.rel target = $region51
      $region56: #{lstm_model_forward.1} parent=48 // loop_exit
        _
    $region49: #{lstm_model_forward.1} parent=1 // pred_fallthru
      _
    // Predicated region
    $region75: #{lstm_model_forward.1} parent=1 // pred_check
      _
    $region76: #{lstm_model_forward.1} parent=1 // pred_check_branch
      %249 = sbr.rel (0) target = $region78
    $region77: #{lstm_model_forward.1} parent=1 // pred_region
      %250 = vsyncadd [#allocation4], 2048
    $region78: #{lstm_model_forward.1} parent=1 // pred_fallthru
      _
    %s251 = scalar_lea.sflag [#allocation4], 1
    // Predicated region
    $region79: #{lstm_model_forward.1} parent=1 // pred_check
      _
    $region80: #{lstm_model_forward.1} parent=1 // pred_check_branch
      %253 = sbr.rel target = $region82
    $region81: #{lstm_model_forward.1} parent=1 // pred_region
      %254 = sst [smem:[#allocation15]] [#allocation14]
      %255 = sst [smem:[#allocation16]] [#allocation13]
    $region82: #{lstm_model_forward.1} parent=1 // pred_fallthru
      _
    %257 = shalt.err (0)
    %s259 = sshll.u32 [#allocation3], 4
    %s260 = int_to_ptr.vmem [resolvable:$true] %s259
    %262 = dma.hbm_to_vmem [thread:$0]  %s6, 8192, %s260, %s251
    %v263 = vlaneseq
    %v264 = vand.u32 %v263, 127
    %v265 = vadd.s32 %v264, 128
    %vm266 = vcmp.lt.s32.totalorder %v264, 0
    %v267 = vsub.s32 0, %v264
    %v268 = vsel %vm266, %v267, %v264
    %v269 = vshrl.u32 %v268, 7
    %v270 = vand.u32 %v268, 127
    %v271 = vsub.s32 0, %v270
    %v272 = vsel %vm266, %v271, %v270
    %vm273 = vcmp.lt.s32.totalorder %v265, 0
    %v274 = vsub.s32 0, %v265
    %v275 = vsel %vm273, %v274, %v265
    %v276 = vshrl.u32 %v275, 7
    %v277 = vand.u32 %v275, 127
    %v278 = vsub.s32 0, %v277
    %v279 = vsel %vm273, %v278, %v277
    %vm280 = vcmp.ne.s32.totalorder %v272, 0
    %vm281 = vcmp.ne.s32.totalorder %v279, 0
    %vm282 = vcmp.lt.s32.totalorder %v272, 0
    %vm283 = vcmp.lt.s32.totalorder %v279, 0
    %vm284 = vmand %vm282, %vm280
    %vm285 = vmand %vm283, %vm281
    %v286 = vadd.s32 %v272, 128
    %v287 = vadd.s32 %v279, 128
    %v288 = vsel %vm284, %v286, %v272
    %v289 = vsel %vm285, %v287, %v279
    %vm290 = vcmp.lt.s32.totalorder %v288, 96
    %vm291 = vcmp.lt.s32.totalorder %v289, 96
    %v292 = vsel %vm290, 0.5, 1.0
    %v293 = vsel %vm291, 0.5, 1.0
    %v294 = vsel %vm290, 0.5, 0.0
    %v295 = vsel %vm291, 0.5, 0.0
    %v296 = vld [vmem:[%s0] sm:$0xff]
    %v297 = vld [vmem:[%s0 + $0x8] sm:$0xff]
    %v298 = vld [vmem:[%s0 + $0x10] sm:$0xff]
    %v299 = vld [vmem:[%s0 + $0x18] sm:$0xff]
    %v300 = vld [vmem:[%s0 + $0x20] sm:$0xff]
    %v301 = vld [vmem:[%s0 + $0x28] sm:$0xff]
    %v302 = vld [vmem:[%s0 + $0x30] sm:$0xff]
    %v303 = vld [vmem:[%s0 + $0x38] sm:$0xff]
    %v304 = vld [vmem:[%s0 + $0x40] sm:$0xff]
    %v305 = vpack.c.bf16 %v297, %v296
    %v306 = vpack.c.bf16 %v299, %v298
    %v307 = vpack.c.bf16 %v301, %v300
    %v308 = vpack.c.bf16 %v303, %v302
    %v309 = vpack.c.bf16 %v304, %v304
    %v310 = vld [vmem:[#allocation5] sm:$0xf]
    %v311 = vld [vmem:[%s2] sm:$0x3]
    %v313 = vlaneseq
    %v314 = vshrl.u32 %v313, 7
    %v315 = vsub.s32 0, %v314
    %v316 = vrot.slane %v311, %v315
    %v317 = vlaneseq
    %v318 = vshrl.u32 %v317, 7
    %v319 = vsub.s32 1, %v318
    %v320 = vrot.slane %v311, %v319
    %v325 = vunpack.c.l.s4 1983009808
    %v326 = vunpack.c.0.s8 %v325
    %v327 = vlaneseq
    %v328 = vshrl.u32 %v327, 7
    %v329 = vsub.s32 %v326, %v328
    %v330 = vrot.slane %v310, %v329
    %v331 = vcombine.high %v330, %v330
    %vm332 = vcmask 31744
    %v334 = vsel %vm332, %v305, 0
    %v337 = vsel %vm332, %v306, 0
    %v340 = vsel %vm332, %v307, 0
    %v343 = vsel %vm332, %v308, 0
    %v346 = vsel %vm332, %v309, 0
    %vm348 = vcmask 1041408
    %v350 = vsel %vm348, %v330, 0
    %v353 = vsel %vm348, %v331, 0
    %355 = vmatprep.subr.bf16.mxu0 %v353
    %356 = vmatpush1.bf16.msra.mxu0 %v350
    %357 = vmatprep.subr.bf16.mxu0 0
    %358 = vmatpush1.bf16.msra.mxu0 0
    %359 = vmatprep.subr.bf16.mxu0 0
    %360 = vmatpush1.bf16.msra.mxu0 0
    %361 = vmatprep.subr.bf16.mxu0 0
    %362 = vmatpush1.bf16.msra.mxu0 0
    %363 = vmatprep.subr.bf16.mxu0 0
    %364 = vmatpush1.bf16.msra.mxu0 0
    %365 = vmatprep.subr.bf16.mxu0 0
    %366 = vmatpush1.bf16.msra.mxu0 0
    %367 = vmatprep.subr.bf16.mxu0 0
    %368 = vmatpush1.bf16.msra.mxu0 0
    %369 = vmatprep.subr.bf16.mxu0 0
    %370 = vmatpush1.bf16.msra.mxu0 0
    %371 = vmatprep.subr.bf16.mxu0 0
    %372 = vmatpush1.bf16.msra.mxu0 0
    %373 = vmatprep.subr.bf16.mxu0 0
    %374 = vmatpush1.bf16.msra.mxu0 0
    %375 = vmatprep.subr.bf16.mxu0 0
    %376 = vmatpush1.bf16.msra.mxu0 0
    %377 = vmatprep.subr.bf16.mxu0 0
    %378 = vmatpush1.bf16.msra.mxu0 0
    %379 = vmatprep.subr.bf16.mxu0 0
    %380 = vmatpush1.bf16.msra.mxu0 0
    %381 = vmatprep.subr.bf16.mxu0 0
    %382 = vmatpush1.bf16.msra.mxu0 0
    %383 = vmatprep.subr.bf16.mxu0 0
    %384 = vmatpush1.bf16.msra.mxu0 0
    %385 = vmatprep.subr.bf16.mxu0 0
    %386 = vmatpush1.bf16.msra.mxu0 0
    %387 = vmatprep.mubr.bf16.mxu0 0
    %388 = vmatmul.mubr.bf16.gmra.mrb[0].mxu0 %v334
    %v389 = vpop.f32.mrb[0].mxu0
    %v390 = vadd.f32 %v316, %v389
    %v391 = vpop.f32.mrb[0].mxu0
    %v392 = vpop.f32.mrb[0].mxu0
    %v393 = vadd.f32 %v316, %v392
    %v394 = vpop.f32.mrb[0].mxu0
    %v395 = vadd.f32 %v320, %v394
    %396 = vmatprep.mubr.bf16.mxu0 0
    %397 = vmatmul.mubr.bf16.gmra.mrb[0].mxu0 %v337
    %v398 = vpop.f32.mrb[0].mxu0
    %v399 = vadd.f32 %v316, %v398
    %v400 = vpop.f32.mrb[0].mxu0
    %v401 = vadd.f32 %v320, %v400
    %v402 = vpop.f32.mrb[0].mxu0
    %v403 = vadd.f32 %v316, %v402
    %v404 = vpop.f32.mrb[0].mxu0
    %v405 = vadd.f32 %v320, %v404
    %406 = vmatprep.mubr.bf16.mxu0 0
    %407 = vmatmul.mubr.bf16.gmra.mrb[0].mxu0 %v340
    %v408 = vpop.f32.mrb[0].mxu0
    %v409 = vadd.f32 %v316, %v408
    %v410 = vpop.f32.mrb[0].mxu0
    %v411 = vadd.f32 %v320, %v410
    %v412 = vpop.f32.mrb[0].mxu0
    %v413 = vadd.f32 %v316, %v412
    %v414 = vpop.f32.mrb[0].mxu0
    %v415 = vadd.f32 %v320, %v414
    %416 = vmatprep.mubr.bf16.mxu0 0
    %417 = vmatmul.mubr.bf16.gmra.mrb[0].mxu0 %v343
    %v418 = vpop.f32.mrb[0].mxu0
    %v419 = vadd.f32 %v316, %v418
    %v420 = vpop.f32.mrb[0].mxu0
    %v421 = vadd.f32 %v320, %v420
    %v422 = vpop.f32.mrb[0].mxu0
    %v423 = vadd.f32 %v316, %v422
    %v424 = vpop.f32.mrb[0].mxu0
    %v425 = vadd.f32 %v320, %v424
    %426 = vmatprep.mubr.bf16.mxu0 0
    %427 = vmatmul.mubr.bf16.gmra.mrb[0].mxu0 %v346
    %v428 = vpop.f32.mrb[0].mxu0
    %v429 = vpop.f32.mrb[0].mxu0
    %v430 = vadd.f32 %v320, %v429
    %v431 = vpop.f32.mrb[0].mxu0
    %v432 = vpop.f32.mrb[0].mxu0
    %433 = vdwg.mxu0
    %v434 = vld [vmem:[#allocation7] sm:$0xff]
    %v435 = vld [vmem:[#allocation7 + $0x8] sm:$0xff]
    %v436 = vld [vmem:[#allocation7 + $0x10] sm:$0xff]
    %v437 = vld [vmem:[#allocation7 + $0x18] sm:$0xff]
    %v438 = vld [vmem:[#allocation7 + $0x20] sm:$0xff]
    %v439 = vld [vmem:[#allocation7 + $0x28] sm:$0xff]
    %v440 = vld [vmem:[#allocation7 + $0x30] sm:$0xff]
    %v441 = vld [vmem:[#allocation7 + $0x38] sm:$0xff]
    %v442 = vpack.c.bf16 0.0, 0.0
    %v451 = vunpack.c.l.b16 %v434
    %v452 = vunpack.c.h.b16 %v434
    %v453 = vunpack.c.l.b16 %v435
    %v454 = vunpack.c.h.b16 %v435
    %v455 = vunpack.c.l.b16 %v436
    %v456 = vunpack.c.h.b16 %v436
    %v457 = vunpack.c.l.b16 %v437
    %v458 = vunpack.c.h.b16 %v437
    %v459 = vunpack.c.l.b16 %v438
    %v460 = vunpack.c.h.b16 %v438
    %v461 = vunpack.c.l.b16 %v439
    %v462 = vunpack.c.h.b16 %v439
    %v463 = vunpack.c.l.b16 %v440
    %v464 = vunpack.c.h.b16 %v440
    %v465 = vunpack.c.l.b16 %v441
    %v466 = vunpack.c.h.b16 %v441
    %v467 = vpack.c.b16 %v453, %v451
    %v468 = vpack.c.b16 %v454, %v452
    %v469 = vpack.c.b16 %v457, %v455
    %v470 = vpack.c.b16 %v458, %v456
    %v471 = vpack.c.b16 %v461, %v459
    %v472 = vpack.c.b16 %v462, %v460
    %v473 = vpack.c.b16 %v465, %v463
    %v474 = vpack.c.b16 %v466, %v464
    %vm483 = vcmask 523264
    %v485 = vsel %vm483, %v442, 0
    %487 = vmatprep.subr.bf16.mxu0 %v468
    %488 = vmatpush1.bf16.msra.mxu0 %v467
    %489 = vmatprep.subr.bf16.mxu0 %v470
    %490 = vmatpush1.bf16.msra.mxu0 %v469
    %491 = vmatprep.subr.bf16.mxu0 %v472
    %492 = vmatpush1.bf16.msra.mxu0 %v471
    %493 = vmatprep.subr.bf16.mxu0 %v474
    %494 = vmatpush1.bf16.msra.mxu0 %v473
    %495 = vmatprep.subr.bf16.mxu0 0
    %496 = vmatpush1.bf16.msra.mxu0 0
    %497 = vmatprep.subr.bf16.mxu0 0
    %498 = vmatpush1.bf16.msra.mxu0 0
    %499 = vmatprep.subr.bf16.mxu0 0
    %500 = vmatpush1.bf16.msra.mxu0 0
    %501 = vmatprep.subr.bf16.mxu0 0
    %502 = vmatpush1.bf16.msra.mxu0 0
    %503 = vmatprep.subr.bf16.mxu0 0
    %504 = vmatpush1.bf16.msra.mxu0 0
    %505 = vmatprep.subr.bf16.mxu0 0
    %506 = vmatpush1.bf16.msra.mxu0 0
    %507 = vmatprep.subr.bf16.mxu0 0
    %508 = vmatpush1.bf16.msra.mxu0 0
    %509 = vmatprep.subr.bf16.mxu0 0
    %510 = vmatpush1.bf16.msra.mxu0 0
    %511 = vmatprep.subr.bf16.mxu0 0
    %512 = vmatpush1.bf16.msra.mxu0 0
    %513 = vmatprep.subr.bf16.mxu0 0
    %514 = vmatpush1.bf16.msra.mxu0 0
    %515 = vmatprep.subr.bf16.mxu0 0
    %516 = vmatpush1.bf16.msra.mxu0 0
    %517 = vmatprep.subr.bf16.mxu0 0
    %518 = vmatpush1.bf16.msra.mxu0 0
    %519 = vmatprep.mubr.bf16.mxu0 0
    %520 = vmatmul.mubr.bf16.gmra.mrb[0].mxu0 %v485
    %v521 = vpop.f32.mrb[0].mxu0
    %v522 = vadd.f32 0.0, %v521
    %v523 = vpop.f32.mrb[0].mxu0
    %v524 = vpop.f32.mrb[0].mxu0
    %v525 = vpop.f32.mrb[0].mxu0
    %526 = vdwg.mxu0
    %v527 = vadd.f32 %v390, %v522
    %v528 = vmul.f32 %v292, %v527
    %v529 = vtanh.pop %v528
    %v530 = vmul.f32 %v292, %v529
    %v531 = vadd.f32 %v530, %v294
    %v532 = vmul.f32 %v531, 0.0
    %534 = vrot.lane.b32.xlu0 %v531, 32
    %v535 = vpop.permute.xlu0 %534
    %v537 = vmul.f32 %v531, %v535
    %539 = vrot.lane.b32.xlu0 %v537, 32
    %v540 = vpop.permute.xlu0 %539
    %v542 = vadd.f32 %v532, %v540
    %v543 = vtanh.pop %v542
    %545 = vrot.lane.b32.xlu0 %v543, 32
    %v546 = vpop.permute.xlu0 %545
    %v548 = vmul.f32 %v531, %v546
    %550 = vrot.lane.b32.xlu0 %v548, 64
    %v551 = vpop.permute.xlu0 %550
    %vm553 = vcmask 261120
    %v554 = vsel %vm553, %v551, 0.0
    %v555 = vpack.c.bf16 %v554, %v554
    %v557 = vsel %vm483, %v555, 0
    %559 = vmatprep.subr.bf16.mxu0 %v468
    %560 = vmatpush1.bf16.msra.mxu0 %v467
    %561 = vmatprep.subr.bf16.mxu0 %v470
    %562 = vmatpush1.bf16.msra.mxu0 %v469
    %563 = vmatprep.subr.bf16.mxu0 %v472
    %564 = vmatpush1.bf16.msra.mxu0 %v471
    %565 = vmatprep.subr.bf16.mxu0 %v474
    %566 = vmatpush1.bf16.msra.mxu0 %v473
    %567 = vmatprep.subr.bf16.mxu0 0
    %568 = vmatpush1.bf16.msra.mxu0 0
    %569 = vmatprep.subr.bf16.mxu0 0
    %570 = vmatpush1.bf16.msra.mxu0 0
    %571 = vmatprep.subr.bf16.mxu0 0
    %572 = vmatpush1.bf16.msra.mxu0 0
    %573 = vmatprep.subr.bf16.mxu0 0
    %574 = vmatpush1.bf16.msra.mxu0 0
    %575 = vmatprep.subr.bf16.mxu0 0
    %576 = vmatpush1.bf16.msra.mxu0 0
    %577 = vmatprep.subr.bf16.mxu0 0
    %578 = vmatpush1.bf16.msra.mxu0 0
    %579 = vmatprep.subr.bf16.mxu0 0
    %580 = vmatpush1.bf16.msra.mxu0 0
    %581 = vmatprep.subr.bf16.mxu0 0
    %582 = vmatpush1.bf16.msra.mxu0 0
    %583 = vmatprep.subr.bf16.mxu0 0
    %584 = vmatpush1.bf16.msra.mxu0 0
    %585 = vmatprep.subr.bf16.mxu0 0
    %586 = vmatpush1.bf16.msra.mxu0 0
    %587 = vmatprep.subr.bf16.mxu0 0
    %588 = vmatpush1.bf16.msra.mxu0 0
    %589 = vmatprep.subr.bf16.mxu0 0
    %590 = vmatpush1.bf16.msra.mxu0 0
    %591 = vmatprep.mubr.bf16.mxu0 0
    %592 = vmatmul.mubr.bf16.gmra.mrb[0].mxu0 %v557
    %v593 = vpop.f32.mrb[0].mxu0
    %v594 = vadd.f32 0.0, %v593
    %v595 = vpop.f32.mrb[0].mxu0
    %v596 = vadd.f32 0.0, %v595
    %v597 = vpop.f32.mrb[0].mxu0
    %v598 = vpop.f32.mrb[0].mxu0
    %599 = vdwg.mxu0
    %v600 = vadd.f32 %v393, %v594
    %v601 = vadd.f32 %v395, %v596
    %v602 = vmul.f32 %v292, %v600
    %v603 = vmul.f32 %v293, %v601
    %v604 = vtanh.pop %v602
    %v605 = vtanh.pop %v603
    %v606 = vmul.f32 %v292, %v604
    %v607 = vmul.f32 %v293, %v605
    %v608 = vadd.f32 %v606, %v294
    %v609 = vadd.f32 %v607, %v295
    %v610 = vmul.f32 %v608, %v542
    %612 = vrot.lane.b32.xlu0 %v608, 32
    %v613 = vpop.permute.xlu0 %612
    %v615 = vmul.f32 %v608, %v613
    %617 = vrot.lane.b32.xlu0 %v615, 32
    %v618 = vpop.permute.xlu0 %617
    %v620 = vadd.f32 %v610, %v618
    %v621 = vtanh.pop %v620
    %623 = vrot.lane.b32.xlu0 %v621, 32
    %v624 = vpop.permute.xlu0 %623
    %v626 = vmul.f32 %v608, %v624
    %v627 = vmul.f32 %v609, 0.0
    %629 = vrot.lane.b32.xlu0 %v609, 32
    %v630 = vpop.permute.xlu0 %629
    %v632 = vmul.f32 %v609, %v630
    %634 = vrot.lane.b32.xlu0 %v632, 32
    %v635 = vpop.permute.xlu0 %634
    %v637 = vadd.f32 %v627, %v635
    %v638 = vtanh.pop %v637
    %640 = vrot.lane.b32.xlu0 %v638, 32
    %v641 = vpop.permute.xlu0 %640
    %v643 = vmul.f32 %v609, %v641
    %645 = vrot.lane.b32.xlu0 %v626, 64
    %v646 = vpop.permute.xlu0 %645
    %649 = vrot.lane.b32.xlu0 %v643, 96
    %v650 = vpop.permute.xlu0 %649
    %v652 = vsel %vm553, %v646, %v650
    %v653 = vpack.c.bf16 %v652, %v652
    %v655 = vsel %vm483, %v653, 0
    %657 = vmatprep.subr.bf16.mxu0 %v468
    %658 = vmatpush1.bf16.msra.mxu0 %v467
    %659 = vmatprep.subr.bf16.mxu0 %v470
    %660 = vmatpush1.bf16.msra.mxu0 %v469
    %661 = vmatprep.subr.bf16.mxu0 %v472
    %662 = vmatpush1.bf16.msra.mxu0 %v471
    %663 = vmatprep.subr.bf16.mxu0 %v474
    %664 = vmatpush1.bf16.msra.mxu0 %v473
    %665 = vmatprep.subr.bf16.mxu0 0
    %666 = vmatpush1.bf16.msra.mxu0 0
    %667 = vmatprep.subr.bf16.mxu0 0
    %668 = vmatpush1.bf16.msra.mxu0 0
    %669 = vmatprep.subr.bf16.mxu0 0
    %670 = vmatpush1.bf16.msra.mxu0 0
    %671 = vmatprep.subr.bf16.mxu0 0
    %672 = vmatpush1.bf16.msra.mxu0 0
    %673 = vmatprep.subr.bf16.mxu0 0
    %674 = vmatpush1.bf16.msra.mxu0 0
    %675 = vmatprep.subr.bf16.mxu0 0
    %676 = vmatpush1.bf16.msra.mxu0 0
    %677 = vmatprep.subr.bf16.mxu0 0
    %678 = vmatpush1.bf16.msra.mxu0 0
    %679 = vmatprep.subr.bf16.mxu0 0
    %680 = vmatpush1.bf16.msra.mxu0 0
    %681 = vmatprep.subr.bf16.mxu0 0
    %682 = vmatpush1.bf16.msra.mxu0 0
    %683 = vmatprep.subr.bf16.mxu0 0
    %684 = vmatpush1.bf16.msra.mxu0 0
    %685 = vmatprep.subr.bf16.mxu0 0
    %686 = vmatpush1.bf16.msra.mxu0 0
    %687 = vmatprep.subr.bf16.mxu0 0
    %688 = vmatpush1.bf16.msra.mxu0 0
    %689 = vmatprep.mubr.bf16.mxu0 0
    %690 = vmatmul.mubr.bf16.gmra.mrb[0].mxu0 %v655
    %v691 = vpop.f32.mrb[0].mxu0
    %v692 = vadd.f32 0.0, %v691
    %v693 = vpop.f32.mrb[0].mxu0
    %v694 = vadd.f32 0.0, %v693
    %v695 = vpop.f32.mrb[0].mxu0
    %v696 = vpop.f32.mrb[0].mxu0
    %697 = vdwg.mxu0
    %v698 = vadd.f32 %v399, %v692
    %v699 = vadd.f32 %v401, %v694
    %v700 = vmul.f32 %v292, %v698
    %v701 = vmul.f32 %v293, %v699
    %v702 = vtanh.pop %v700
    %v703 = vtanh.pop %v701
    %v704 = vmul.f32 %v292, %v702
    %v705 = vmul.f32 %v293, %v703
    %v706 = vadd.f32 %v704, %v294
    %v707 = vadd.f32 %v705, %v295
    %v708 = vmul.f32 %v706, %v620
    %710 = vrot.lane.b32.xlu0 %v706, 32
    %v711 = vpop.permute.xlu0 %710
    %v713 = vmul.f32 %v706, %v711
    %715 = vrot.lane.b32.xlu0 %v713, 32
    %v716 = vpop.permute.xlu0 %715
    %v718 = vadd.f32 %v708, %v716
    %v719 = vtanh.pop %v718
    %721 = vrot.lane.b32.xlu0 %v719, 32
    %v722 = vpop.permute.xlu0 %721
    %v724 = vmul.f32 %v706, %v722
    %v725 = vmul.f32 %v707, %v637
    %727 = vrot.lane.b32.xlu0 %v707, 32
    %v728 = vpop.permute.xlu0 %727
    %v730 = vmul.f32 %v707, %v728
    %732 = vrot.lane.b32.xlu0 %v730, 32
    %v733 = vpop.permute.xlu0 %732
    %v735 = vadd.f32 %v725, %v733
    %v736 = vtanh.pop %v735
    %738 = vrot.lane.b32.xlu0 %v736, 32
    %v739 = vpop.permute.xlu0 %738
    %v741 = vmul.f32 %v707, %v739
    %743 = vrot.lane.b32.xlu0 %v724, 64
    %v744 = vpop.permute.xlu0 %743
    %747 = vrot.lane.b32.xlu0 %v741, 96
    %v748 = vpop.permute.xlu0 %747
    %v750 = vsel %vm553, %v744, %v748
    %v751 = vpack.c.bf16 %v750, %v750
    %v753 = vsel %vm483, %v751, 0
    %755 = vmatprep.subr.bf16.mxu0 %v468
    %756 = vmatpush1.bf16.msra.mxu0 %v467
    %757 = vmatprep.subr.bf16.mxu0 %v470
    %758 = vmatpush1.bf16.msra.mxu0 %v469
    %759 = vmatprep.subr.bf16.mxu0 %v472
    %760 = vmatpush1.bf16.msra.mxu0 %v471
    %761 = vmatprep.subr.bf16.mxu0 %v474
    %762 = vmatpush1.bf16.msra.mxu0 %v473
    %763 = vmatprep.subr.bf16.mxu0 0
    %764 = vmatpush1.bf16.msra.mxu0 0
    %765 = vmatprep.subr.bf16.mxu0 0
    %766 = vmatpush1.bf16.msra.mxu0 0
    %767 = vmatprep.subr.bf16.mxu0 0
    %768 = vmatpush1.bf16.msra.mxu0 0
    %769 = vmatprep.subr.bf16.mxu0 0
    %770 = vmatpush1.bf16.msra.mxu0 0
    %771 = vmatprep.subr.bf16.mxu0 0
    %772 = vmatpush1.bf16.msra.mxu0 0
    %773 = vmatprep.subr.bf16.mxu0 0
    %774 = vmatpush1.bf16.msra.mxu0 0
    %775 = vmatprep.subr.bf16.mxu0 0
    %776 = vmatpush1.bf16.msra.mxu0 0
    %777 = vmatprep.subr.bf16.mxu0 0
    %778 = vmatpush1.bf16.msra.mxu0 0
    %779 = vmatprep.subr.bf16.mxu0 0
    %780 = vmatpush1.bf16.msra.mxu0 0
    %781 = vmatprep.subr.bf16.mxu0 0
    %782 = vmatpush1.bf16.msra.mxu0 0
    %783 = vmatprep.subr.bf16.mxu0 0
    %784 = vmatpush1.bf16.msra.mxu0 0
    %785 = vmatprep.subr.bf16.mxu0 0
    %786 = vmatpush1.bf16.msra.mxu0 0
    %787 = vmatprep.mubr.bf16.mxu0 0
    %788 = vmatmul.mubr.bf16.gmra.mrb[0].mxu0 %v753
    %v789 = vpop.f32.mrb[0].mxu0
    %v790 = vadd.f32 0.0, %v789
    %v791 = vpop.f32.mrb[0].mxu0
    %v792 = vadd.f32 0.0, %v791
    %v793 = vpop.f32.mrb[0].mxu0
    %v794 = vpop.f32.mrb[0].mxu0
    %795 = vdwg.mxu0
    %v796 = vadd.f32 %v403, %v790
    %v797 = vadd.f32 %v405, %v792
    %v798 = vmul.f32 %v292, %v796
    %v799 = vmul.f32 %v293, %v797
    %v800 = vtanh.pop %v798
    %v801 = vtanh.pop %v799
    %v802 = vmul.f32 %v292, %v800
    %v803 = vmul.f32 %v293, %v801
    %v804 = vadd.f32 %v802, %v294
    %v805 = vadd.f32 %v803, %v295
    %v806 = vmul.f32 %v804, %v718
    %808 = vrot.lane.b32.xlu0 %v804, 32
    %v809 = vpop.permute.xlu0 %808
    %v811 = vmul.f32 %v804, %v809
    %813 = vrot.lane.b32.xlu0 %v811, 32
    %v814 = vpop.permute.xlu0 %813
    %v816 = vadd.f32 %v806, %v814
    %v817 = vtanh.pop %v816
    %819 = vrot.lane.b32.xlu0 %v817, 32
    %v820 = vpop.permute.xlu0 %819
    %v822 = vmul.f32 %v804, %v820
    %v823 = vmul.f32 %v805, %v735
    %825 = vrot.lane.b32.xlu0 %v805, 32
    %v826 = vpop.permute.xlu0 %825
    %v828 = vmul.f32 %v805, %v826
    %830 = vrot.lane.b32.xlu0 %v828, 32
    %v831 = vpop.permute.xlu0 %830
    %v833 = vadd.f32 %v823, %v831
    %v834 = vtanh.pop %v833
    %836 = vrot.lane.b32.xlu0 %v834, 32
    %v837 = vpop.permute.xlu0 %836
    %v839 = vmul.f32 %v805, %v837
    %841 = vrot.lane.b32.xlu0 %v822, 64
    %v842 = vpop.permute.xlu0 %841
    %845 = vrot.lane.b32.xlu0 %v839, 96
    %v846 = vpop.permute.xlu0 %845
    %v848 = vsel %vm553, %v842, %v846
    %v849 = vpack.c.bf16 %v848, %v848
    %v851 = vsel %vm483, %v849, 0
    %853 = vmatprep.subr.bf16.mxu0 %v468
    %854 = vmatpush1.bf16.msra.mxu0 %v467
    %855 = vmatprep.subr.bf16.mxu0 %v470
    %856 = vmatpush1.bf16.msra.mxu0 %v469
    %857 = vmatprep.subr.bf16.mxu0 %v472
    %858 = vmatpush1.bf16.msra.mxu0 %v471
    %859 = vmatprep.subr.bf16.mxu0 %v474
    %860 = vmatpush1.bf16.msra.mxu0 %v473
    %861 = vmatprep.subr.bf16.mxu0 0
    %862 = vmatpush1.bf16.msra.mxu0 0
    %863 = vmatprep.subr.bf16.mxu0 0
    %864 = vmatpush1.bf16.msra.mxu0 0
    %865 = vmatprep.subr.bf16.mxu0 0
    %866 = vmatpush1.bf16.msra.mxu0 0
    %867 = vmatprep.subr.bf16.mxu0 0
    %868 = vmatpush1.bf16.msra.mxu0 0
    %869 = vmatprep.subr.bf16.mxu0 0
    %870 = vmatpush1.bf16.msra.mxu0 0
    %871 = vmatprep.subr.bf16.mxu0 0
    %872 = vmatpush1.bf16.msra.mxu0 0
    %873 = vmatprep.subr.bf16.mxu0 0
    %874 = vmatpush1.bf16.msra.mxu0 0
    %875 = vmatprep.subr.bf16.mxu0 0
    %876 = vmatpush1.bf16.msra.mxu0 0
    %877 = vmatprep.subr.bf16.mxu0 0
    %878 = vmatpush1.bf16.msra.mxu0 0
    %879 = vmatprep.subr.bf16.mxu0 0
    %880 = vmatpush1.bf16.msra.mxu0 0
    %881 = vmatprep.subr.bf16.mxu0 0
    %882 = vmatpush1.bf16.msra.mxu0 0
    %883 = vmatprep.subr.bf16.mxu0 0
    %884 = vmatpush1.bf16.msra.mxu0 0
    %885 = vmatprep.mubr.bf16.mxu0 0
    %886 = vmatmul.mubr.bf16.gmra.mrb[0].mxu0 %v851
    %v887 = vpop.f32.mrb[0].mxu0
    %v888 = vadd.f32 0.0, %v887
    %v889 = vpop.f32.mrb[0].mxu0
    %v890 = vadd.f32 0.0, %v889
    %v891 = vpop.f32.mrb[0].mxu0
    %v892 = vpop.f32.mrb[0].mxu0
    %893 = vdwg.mxu0
    %v894 = vadd.f32 %v409, %v888
    %v895 = vadd.f32 %v411, %v890
    %v896 = vmul.f32 %v292, %v894
    %v897 = vmul.f32 %v293, %v895
    %v898 = vtanh.pop %v896
    %v899 = vtanh.pop %v897
    %v900 = vmul.f32 %v292, %v898
    %v901 = vmul.f32 %v293, %v899
    %v902 = vadd.f32 %v900, %v294
    %v903 = vadd.f32 %v901, %v295
    %v904 = vmul.f32 %v902, %v816
    %906 = vrot.lane.b32.xlu0 %v902, 32
    %v907 = vpop.permute.xlu0 %906
    %v909 = vmul.f32 %v902, %v907
    %911 = vrot.lane.b32.xlu0 %v909, 32
    %v912 = vpop.permute.xlu0 %911
    %v914 = vadd.f32 %v904, %v912
    %v915 = vtanh.pop %v914
    %917 = vrot.lane.b32.xlu0 %v915, 32
    %v918 = vpop.permute.xlu0 %917
    %v920 = vmul.f32 %v902, %v918
    %v921 = vmul.f32 %v903, %v833
    %923 = vrot.lane.b32.xlu0 %v903, 32
    %v924 = vpop.permute.xlu0 %923
    %v926 = vmul.f32 %v903, %v924
    %928 = vrot.lane.b32.xlu0 %v926, 32
    %v929 = vpop.permute.xlu0 %928
    %v931 = vadd.f32 %v921, %v929
    %v932 = vtanh.pop %v931
    %934 = vrot.lane.b32.xlu0 %v932, 32
    %v935 = vpop.permute.xlu0 %934
    %v937 = vmul.f32 %v903, %v935
    %939 = vrot.lane.b32.xlu0 %v920, 64
    %v940 = vpop.permute.xlu0 %939
    %943 = vrot.lane.b32.xlu0 %v937, 96
    %v944 = vpop.permute.xlu0 %943
    %v946 = vsel %vm553, %v940, %v944
    %v947 = vpack.c.bf16 %v946, %v946
    %v949 = vsel %vm483, %v947, 0
    %951 = vmatprep.subr.bf16.mxu0 %v468
    %952 = vmatpush1.bf16.msra.mxu0 %v467
    %953 = vmatprep.subr.bf16.mxu0 %v470
    %954 = vmatpush1.bf16.msra.mxu0 %v469
    %955 = vmatprep.subr.bf16.mxu0 %v472
    %956 = vmatpush1.bf16.msra.mxu0 %v471
    %957 = vmatprep.subr.bf16.mxu0 %v474
    %958 = vmatpush1.bf16.msra.mxu0 %v473
    %959 = vmatprep.subr.bf16.mxu0 0
    %960 = vmatpush1.bf16.msra.mxu0 0
    %961 = vmatprep.subr.bf16.mxu0 0
    %962 = vmatpush1.bf16.msra.mxu0 0
    %963 = vmatprep.subr.bf16.mxu0 0
    %964 = vmatpush1.bf16.msra.mxu0 0
    %965 = vmatprep.subr.bf16.mxu0 0
    %966 = vmatpush1.bf16.msra.mxu0 0
    %967 = vmatprep.subr.bf16.mxu0 0
    %968 = vmatpush1.bf16.msra.mxu0 0
    %969 = vmatprep.subr.bf16.mxu0 0
    %970 = vmatpush1.bf16.msra.mxu0 0
    %971 = vmatprep.subr.bf16.mxu0 0
    %972 = vmatpush1.bf16.msra.mxu0 0
    %973 = vmatprep.subr.bf16.mxu0 0
    %974 = vmatpush1.bf16.msra.mxu0 0
    %975 = vmatprep.subr.bf16.mxu0 0
    %976 = vmatpush1.bf16.msra.mxu0 0
    %977 = vmatprep.subr.bf16.mxu0 0
    %978 = vmatpush1.bf16.msra.mxu0 0
    %979 = vmatprep.subr.bf16.mxu0 0
    %980 = vmatpush1.bf16.msra.mxu0 0
    %981 = vmatprep.subr.bf16.mxu0 0
    %982 = vmatpush1.bf16.msra.mxu0 0
    %983 = vmatprep.mubr.bf16.mxu0 0
    %984 = vmatmul.mubr.bf16.gmra.mrb[0].mxu0 %v949
    %v985 = vpop.f32.mrb[0].mxu0
    %v986 = vadd.f32 0.0, %v985
    %v987 = vpop.f32.mrb[0].mxu0
    %v988 = vadd.f32 0.0, %v987
    %v989 = vpop.f32.mrb[0].mxu0
    %v990 = vpop.f32.mrb[0].mxu0
    %991 = vdwg.mxu0
    %v992 = vadd.f32 %v413, %v986
    %v993 = vadd.f32 %v415, %v988
    %v994 = vmul.f32 %v292, %v992
    %v995 = vmul.f32 %v293, %v993
    %v996 = vtanh.pop %v994
    %v997 = vtanh.pop %v995
    %v998 = vmul.f32 %v292, %v996
    %v999 = vmul.f32 %v293, %v997
    %v1000 = vadd.f32 %v998, %v294
    %v1001 = vadd.f32 %v999, %v295
    %v1002 = vmul.f32 %v1000, %v914
    %1004 = vrot.lane.b32.xlu0 %v1000, 32
    %v1005 = vpop.permute.xlu0 %1004
    %v1007 = vmul.f32 %v1000, %v1005
    %1009 = vrot.lane.b32.xlu0 %v1007, 32
    %v1010 = vpop.permute.xlu0 %1009
    %v1012 = vadd.f32 %v1002, %v1010
    %v1013 = vtanh.pop %v1012
    %1015 = vrot.lane.b32.xlu0 %v1013, 32
    %v1016 = vpop.permute.xlu0 %1015
    %v1018 = vmul.f32 %v1000, %v1016
    %v1019 = vmul.f32 %v1001, %v931
    %1021 = vrot.lane.b32.xlu0 %v1001, 32
    %v1022 = vpop.permute.xlu0 %1021
    %v1024 = vmul.f32 %v1001, %v1022
    %1026 = vrot.lane.b32.xlu0 %v1024, 32
    %v1027 = vpop.permute.xlu0 %1026
    %v1029 = vadd.f32 %v1019, %v1027
    %v1030 = vtanh.pop %v1029
    %1032 = vrot.lane.b32.xlu0 %v1030, 32
    %v1033 = vpop.permute.xlu0 %1032
    %v1035 = vmul.f32 %v1001, %v1033
    %1037 = vrot.lane.b32.xlu0 %v1018, 64
    %v1038 = vpop.permute.xlu0 %1037
    %1041 = vrot.lane.b32.xlu0 %v1035, 96
    %v1042 = vpop.permute.xlu0 %1041
    %v1044 = vsel %vm553, %v1038, %v1042
    %v1045 = vpack.c.bf16 %v1044, %v1044
    %v1047 = vsel %vm483, %v1045, 0
    %1049 = vmatprep.subr.bf16.mxu0 %v468
    %1050 = vmatpush1.bf16.msra.mxu0 %v467
    %1051 = vmatprep.subr.bf16.mxu0 %v470
    %1052 = vmatpush1.bf16.msra.mxu0 %v469
    %1053 = vmatprep.subr.bf16.mxu0 %v472
    %1054 = vmatpush1.bf16.msra.mxu0 %v471
    %1055 = vmatprep.subr.bf16.mxu0 %v474
    %1056 = vmatpush1.bf16.msra.mxu0 %v473
    %1057 = vmatprep.subr.bf16.mxu0 0
    %1058 = vmatpush1.bf16.msra.mxu0 0
    %1059 = vmatprep.subr.bf16.mxu0 0
    %1060 = vmatpush1.bf16.msra.mxu0 0
    %1061 = vmatprep.subr.bf16.mxu0 0
    %1062 = vmatpush1.bf16.msra.mxu0 0
    %1063 = vmatprep.subr.bf16.mxu0 0
    %1064 = vmatpush1.bf16.msra.mxu0 0
    %1065 = vmatprep.subr.bf16.mxu0 0
    %1066 = vmatpush1.bf16.msra.mxu0 0
    %1067 = vmatprep.subr.bf16.mxu0 0
    %1068 = vmatpush1.bf16.msra.mxu0 0
    %1069 = vmatprep.subr.bf16.mxu0 0
    %1070 = vmatpush1.bf16.msra.mxu0 0
    %1071 = vmatprep.subr.bf16.mxu0 0
    %1072 = vmatpush1.bf16.msra.mxu0 0
    %1073 = vmatprep.subr.bf16.mxu0 0
    %1074 = vmatpush1.bf16.msra.mxu0 0
    %1075 = vmatprep.subr.bf16.mxu0 0
    %1076 = vmatpush1.bf16.msra.mxu0 0
    %1077 = vmatprep.subr.bf16.mxu0 0
    %1078 = vmatpush1.bf16.msra.mxu0 0
    %1079 = vmatprep.subr.bf16.mxu0 0
    %1080 = vmatpush1.bf16.msra.mxu0 0
    %1081 = vmatprep.mubr.bf16.mxu0 0
    %1082 = vmatmul.mubr.bf16.gmra.mrb[0].mxu0 %v1047
    %v1083 = vpop.f32.mrb[0].mxu0
    %v1084 = vadd.f32 0.0, %v1083
    %v1085 = vpop.f32.mrb[0].mxu0
    %v1086 = vadd.f32 0.0, %v1085
    %v1087 = vpop.f32.mrb[0].mxu0
    %v1088 = vpop.f32.mrb[0].mxu0
    %1089 = vdwg.mxu0
    %v1090 = vadd.f32 %v419, %v1084
    %v1091 = vadd.f32 %v421, %v1086
    %v1092 = vmul.f32 %v292, %v1090
    %v1093 = vmul.f32 %v293, %v1091
    %v1094 = vtanh.pop %v1092
    %v1095 = vtanh.pop %v1093
    %v1096 = vmul.f32 %v292, %v1094
    %v1097 = vmul.f32 %v293, %v1095
    %v1098 = vadd.f32 %v1096, %v294
    %v1099 = vadd.f32 %v1097, %v295
    %v1100 = vmul.f32 %v1098, %v1012
    %1102 = vrot.lane.b32.xlu0 %v1098, 32
    %v1103 = vpop.permute.xlu0 %1102
    %v1105 = vmul.f32 %v1098, %v1103
    %1107 = vrot.lane.b32.xlu0 %v1105, 32
    %v1108 = vpop.permute.xlu0 %1107
    %v1110 = vadd.f32 %v1100, %v1108
    %v1111 = vtanh.pop %v1110
    %1113 = vrot.lane.b32.xlu0 %v1111, 32
    %v1114 = vpop.permute.xlu0 %1113
    %v1116 = vmul.f32 %v1098, %v1114
    %v1117 = vmul.f32 %v1099, %v1029
    %1119 = vrot.lane.b32.xlu0 %v1099, 32
    %v1120 = vpop.permute.xlu0 %1119
    %v1122 = vmul.f32 %v1099, %v1120
    %1124 = vrot.lane.b32.xlu0 %v1122, 32
    %v1125 = vpop.permute.xlu0 %1124
    %v1127 = vadd.f32 %v1117, %v1125
    %v1128 = vtanh.pop %v1127
    %1130 = vrot.lane.b32.xlu0 %v1128, 32
    %v1131 = vpop.permute.xlu0 %1130
    %v1133 = vmul.f32 %v1099, %v1131
    %1135 = vrot.lane.b32.xlu0 %v1116, 64
    %v1136 = vpop.permute.xlu0 %1135
    %1139 = vrot.lane.b32.xlu0 %v1133, 96
    %v1140 = vpop.permute.xlu0 %1139
    %v1142 = vsel %vm553, %v1136, %v1140
    %v1143 = vpack.c.bf16 %v1142, %v1142
    %v1145 = vsel %vm483, %v1143, 0
    %1147 = vmatprep.subr.bf16.mxu0 %v468
    %1148 = vmatpush1.bf16.msra.mxu0 %v467
    %1149 = vmatprep.subr.bf16.mxu0 %v470
    %1150 = vmatpush1.bf16.msra.mxu0 %v469
    %1151 = vmatprep.subr.bf16.mxu0 %v472
    %1152 = vmatpush1.bf16.msra.mxu0 %v471
    %1153 = vmatprep.subr.bf16.mxu0 %v474
    %1154 = vmatpush1.bf16.msra.mxu0 %v473
    %1155 = vmatprep.subr.bf16.mxu0 0
    %1156 = vmatpush1.bf16.msra.mxu0 0
    %1157 = vmatprep.subr.bf16.mxu0 0
    %1158 = vmatpush1.bf16.msra.mxu0 0
    %1159 = vmatprep.subr.bf16.mxu0 0
    %1160 = vmatpush1.bf16.msra.mxu0 0
    %1161 = vmatprep.subr.bf16.mxu0 0
    %1162 = vmatpush1.bf16.msra.mxu0 0
    %1163 = vmatprep.subr.bf16.mxu0 0
    %1164 = vmatpush1.bf16.msra.mxu0 0
    %1165 = vmatprep.subr.bf16.mxu0 0
    %1166 = vmatpush1.bf16.msra.mxu0 0
    %1167 = vmatprep.subr.bf16.mxu0 0
    %1168 = vmatpush1.bf16.msra.mxu0 0
    %1169 = vmatprep.subr.bf16.mxu0 0
    %1170 = vmatpush1.bf16.msra.mxu0 0
    %1171 = vmatprep.subr.bf16.mxu0 0
    %1172 = vmatpush1.bf16.msra.mxu0 0
    %1173 = vmatprep.subr.bf16.mxu0 0
    %1174 = vmatpush1.bf16.msra.mxu0 0
    %1175 = vmatprep.subr.bf16.mxu0 0
    %1176 = vmatpush1.bf16.msra.mxu0 0
    %1177 = vmatprep.subr.bf16.mxu0 0
    %1178 = vmatpush1.bf16.msra.mxu0 0
    %1179 = vmatprep.mubr.bf16.mxu0 0
    %1180 = vmatmul.mubr.bf16.gmra.mrb[0].mxu0 %v1145
    %v1181 = vpop.f32.mrb[0].mxu0
    %v1182 = vadd.f32 0.0, %v1181
    %v1183 = vpop.f32.mrb[0].mxu0
    %v1184 = vadd.f32 0.0, %v1183
    %v1185 = vpop.f32.mrb[0].mxu0
    %v1186 = vpop.f32.mrb[0].mxu0
    %1187 = vdwg.mxu0
    %v1188 = vadd.f32 %v423, %v1182
    %v1189 = vadd.f32 %v425, %v1184
    %v1190 = vmul.f32 %v292, %v1188
    %v1191 = vmul.f32 %v293, %v1189
    %v1192 = vtanh.pop %v1190
    %v1193 = vtanh.pop %v1191
    %v1194 = vmul.f32 %v292, %v1192
    %v1195 = vmul.f32 %v293, %v1193
    %v1196 = vadd.f32 %v1194, %v294
    %v1197 = vadd.f32 %v1195, %v295
    %v1198 = vmul.f32 %v1196, %v1110
    %1200 = vrot.lane.b32.xlu0 %v1196, 32
    %v1201 = vpop.permute.xlu0 %1200
    %v1203 = vmul.f32 %v1196, %v1201
    %1205 = vrot.lane.b32.xlu0 %v1203, 32
    %v1206 = vpop.permute.xlu0 %1205
    %v1208 = vadd.f32 %v1198, %v1206
    %v1209 = vtanh.pop %v1208
    %1211 = vrot.lane.b32.xlu0 %v1209, 32
    %v1212 = vpop.permute.xlu0 %1211
    %v1214 = vmul.f32 %v1196, %v1212
    %v1215 = vmul.f32 %v1197, %v1127
    %1217 = vrot.lane.b32.xlu0 %v1197, 32
    %v1218 = vpop.permute.xlu0 %1217
    %v1220 = vmul.f32 %v1197, %v1218
    %1222 = vrot.lane.b32.xlu0 %v1220, 32
    %v1223 = vpop.permute.xlu0 %1222
    %v1225 = vadd.f32 %v1215, %v1223
    %v1226 = vtanh.pop %v1225
    %1228 = vrot.lane.b32.xlu0 %v1226, 32
    %v1229 = vpop.permute.xlu0 %1228
    %v1231 = vmul.f32 %v1197, %v1229
    %1233 = vrot.lane.b32.xlu0 %v1214, 64
    %v1234 = vpop.permute.xlu0 %1233
    %1237 = vrot.lane.b32.xlu0 %v1231, 96
    %v1238 = vpop.permute.xlu0 %1237
    %v1240 = vsel %vm553, %v1234, %v1238
    %v1241 = vpack.c.bf16 %v1240, %v1240
    %v1243 = vsel %vm483, %v1241, 0
    %1245 = vmatprep.subr.bf16.mxu0 %v468
    %1246 = vmatpush1.bf16.msra.mxu0 %v467
    %1247 = vmatprep.subr.bf16.mxu0 %v470
    %1248 = vmatpush1.bf16.msra.mxu0 %v469
    %1249 = vmatprep.subr.bf16.mxu0 %v472
    %1250 = vmatpush1.bf16.msra.mxu0 %v471
    %1251 = vmatprep.subr.bf16.mxu0 %v474
    %1252 = vmatpush1.bf16.msra.mxu0 %v473
    %1253 = vmatprep.subr.bf16.mxu0 0
    %1254 = vmatpush1.bf16.msra.mxu0 0
    %1255 = vmatprep.subr.bf16.mxu0 0
    %1256 = vmatpush1.bf16.msra.mxu0 0
    %1257 = vmatprep.subr.bf16.mxu0 0
    %1258 = vmatpush1.bf16.msra.mxu0 0
    %1259 = vmatprep.subr.bf16.mxu0 0
    %1260 = vmatpush1.bf16.msra.mxu0 0
    %1261 = vmatprep.subr.bf16.mxu0 0
    %1262 = vmatpush1.bf16.msra.mxu0 0
    %1263 = vmatprep.subr.bf16.mxu0 0
    %1264 = vmatpush1.bf16.msra.mxu0 0
    %1265 = vmatprep.subr.bf16.mxu0 0
    %1266 = vmatpush1.bf16.msra.mxu0 0
    %1267 = vmatprep.subr.bf16.mxu0 0
    %1268 = vmatpush1.bf16.msra.mxu0 0
    %1269 = vmatprep.subr.bf16.mxu0 0
    %1270 = vmatpush1.bf16.msra.mxu0 0
    %1271 = vmatprep.subr.bf16.mxu0 0
    %1272 = vmatpush1.bf16.msra.mxu0 0
    %1273 = vmatprep.subr.bf16.mxu0 0
    %1274 = vmatpush1.bf16.msra.mxu0 0
    %1275 = vmatprep.subr.bf16.mxu0 0
    %1276 = vmatpush1.bf16.msra.mxu0 0
    %1277 = vmatprep.mubr.bf16.mxu0 0
    %1278 = vmatmul.mubr.bf16.gmra.mrb[0].mxu0 %v1243
    %v1279 = vpop.f32.mrb[0].mxu0
    %v1280 = vpop.f32.mrb[0].mxu0
    %v1281 = vadd.f32 0.0, %v1280
    %v1282 = vpop.f32.mrb[0].mxu0
    %v1283 = vpop.f32.mrb[0].mxu0
    %1284 = vdwg.mxu0
    %v1285 = vadd.f32 %v430, %v1281
    %v1286 = vmul.f32 %v293, %v1285
    %v1287 = vtanh.pop %v1286
    %v1288 = vmul.f32 %v293, %v1287
    %v1289 = vadd.f32 %v1288, %v295
    %v1290 = vmul.f32 %v1289, %v1225
    %1292 = vrot.lane.b32.xlu0 %v1289, 32
    %v1293 = vpop.permute.xlu0 %1292
    %v1295 = vmul.f32 %v1289, %v1293
    %1297 = vrot.lane.b32.xlu0 %v1295, 32
    %v1298 = vpop.permute.xlu0 %1297
    %v1300 = vadd.f32 %v1290, %v1298
    %v1301 = vtanh.pop %v1300
    %1303 = vrot.lane.b32.xlu0 %v1301, 32
    %v1304 = vpop.permute.xlu0 %1303
    %v1306 = vmul.f32 %v1289, %v1304
    %v1307 = vpack.c.bf16 %v1306, %v1306
    %s1308 = smul.u32 4, 4
    %s1309 = smul.u32 %s1308, 8
    %s1310 = sshll.u32 %s1309, 4
    %1311 = dma.done [#allocation4], %s1310
    %v1312 = vld [vmem:[#allocation2] sm:$0xff]
    %v1313 = vld [vmem:[#allocation2 + $0x8] sm:$0xff]
    %v1314 = vld [vmem:[#allocation2 + $0x10] sm:$0xff]
    %v1315 = vld [vmem:[#allocation2 + $0x18] sm:$0xff]
    %v1316 = vld [vmem:[#allocation2 + $0x20] sm:$0xff]
    %v1317 = vld [vmem:[#allocation2 + $0x28] sm:$0xff]
    %v1318 = vld [vmem:[#allocation2 + $0x30] sm:$0xff]
    %v1319 = vld [vmem:[#allocation2 + $0x38] sm:$0xff]
    %v1320 = vld [vmem:[#allocation2 + $0x40] sm:$0xff]
    %v1321 = vld [vmem:[#allocation2 + $0x48] sm:$0xff]
    %v1322 = vld [vmem:[#allocation2 + $0x50] sm:$0xff]
    %v1323 = vld [vmem:[#allocation2 + $0x58] sm:$0xff]
    %v1324 = vld [vmem:[#allocation2 + $0x60] sm:$0xff]
    %v1325 = vld [vmem:[#allocation2 + $0x68] sm:$0xff]
    %v1326 = vld [vmem:[#allocation2 + $0x70] sm:$0xff]
    %v1327 = vld [vmem:[#allocation2 + $0x78] sm:$0xff]
    %v1328 = vld [vmem:[#allocation9] sm:$0xff]
    %v1330 = vlaneseq
    %v1331 = vshrl.u32 %v1330, 7
    %v1332 = vsub.s32 0, %v1331
    %v1333 = vrot.slane %v1328, %v1332
    %v1334 = vlaneseq
    %v1335 = vshrl.u32 %v1334, 7
    %v1336 = vsub.s32 1, %v1335
    %v1337 = vrot.slane %v1328, %v1336
    %v1338 = vlaneseq
    %v1339 = vshrl.u32 %v1338, 7
    %v1340 = vsub.s32 2, %v1339
    %v1341 = vrot.slane %v1328, %v1340
    %v1342 = vlaneseq
    %v1343 = vshrl.u32 %v1342, 7
    %v1344 = vsub.s32 3, %v1343
    %v1345 = vrot.slane %v1328, %v1344
    %v1346 = vlaneseq
    %v1347 = vshrl.u32 %v1346, 7
    %v1348 = vsub.s32 4, %v1347
    %v1349 = vrot.slane %v1328, %v1348
    %v1350 = vlaneseq
    %v1351 = vshrl.u32 %v1350, 7
    %v1352 = vsub.s32 5, %v1351
    %v1353 = vrot.slane %v1328, %v1352
    %v1354 = vlaneseq
    %v1355 = vshrl.u32 %v1354, 7
    %v1356 = vsub.s32 6, %v1355
    %v1357 = vrot.slane %v1328, %v1356
    %v1358 = vlaneseq
    %v1359 = vshrl.u32 %v1358, 7
    %v1360 = vsub.s32 7, %v1359
    %v1361 = vrot.slane %v1328, %v1360
    %1371 = vrot.lane.b32.xlu0 %v1307, 64
    %v1372 = vpop.permute.xlu0 %1371
    %v1374 = vsel %vm553, %v1372, 0
    %1376 = vmatprep.subr.bf16.mxu0 %v1313
    %1377 = vmatpush1.bf16.msra.mxu0 %v1312
    %1378 = vmatprep.subr.bf16.mxu0 %v1321
    %1379 = vmatpush1.bf16.msra.mxu0 %v1320
    %1380 = vmatprep.subr.bf16.mxu0 0
    %1381 = vmatpush1.bf16.msra.mxu0 0
    %1382 = vmatprep.subr.bf16.mxu0 0
    %1383 = vmatpush1.bf16.msra.mxu0 0
    %1384 = vmatprep.subr.bf16.mxu0 0
    %1385 = vmatpush1.bf16.msra.mxu0 0
    %1386 = vmatprep.subr.bf16.mxu0 0
    %1387 = vmatpush1.bf16.msra.mxu0 0
    %1388 = vmatprep.subr.bf16.mxu0 0
    %1389 = vmatpush1.bf16.msra.mxu0 0
    %1390 = vmatprep.subr.bf16.mxu0 0
    %1391 = vmatpush1.bf16.msra.mxu0 0
    %1392 = vmatprep.subr.bf16.mxu0 0
    %1393 = vmatpush1.bf16.msra.mxu0 0
    %1394 = vmatprep.subr.bf16.mxu0 0
    %1395 = vmatpush1.bf16.msra.mxu0 0
    %1396 = vmatprep.subr.bf16.mxu0 0
    %1397 = vmatpush1.bf16.msra.mxu0 0
    %1398 = vmatprep.subr.bf16.mxu0 0
    %1399 = vmatpush1.bf16.msra.mxu0 0
    %1400 = vmatprep.subr.bf16.mxu0 0
    %1401 = vmatpush1.bf16.msra.mxu0 0
    %1402 = vmatprep.subr.bf16.mxu0 0
    %1403 = vmatpush1.bf16.msra.mxu0 0
    %1404 = vmatprep.subr.bf16.mxu0 0
    %1405 = vmatpush1.bf16.msra.mxu0 0
    %1406 = vmatprep.subr.bf16.mxu0 0
    %1407 = vmatpush1.bf16.msra.mxu0 0
    %1408 = vmatprep.mubr.bf16.mxu0 0
    %1409 = vmatmul.mubr.bf16.gmra.mrb[0].mxu0 %v1374
    %v1410 = vpop.f32.mrb[0].mxu0
    %v1411 = vadd.f32 %v1333, %v1410
    %v1412 = vpop.f32.mrb[0].mxu0
    %v1413 = vadd.f32 %v1337, %v1412
    %v1414 = vpop.f32.mrb[0].mxu0
    %v1415 = vpop.f32.mrb[0].mxu0
    %1416 = vdwg.mxu0
    %1417 = vmatprep.subr.bf16.mxu0 %v1315
    %1418 = vmatpush1.bf16.msra.mxu0 %v1314
    %1419 = vmatprep.subr.bf16.mxu0 %v1323
    %1420 = vmatpush1.bf16.msra.mxu0 %v1322
    %1421 = vmatprep.subr.bf16.mxu0 0
    %1422 = vmatpush1.bf16.msra.mxu0 0
    %1423 = vmatprep.subr.bf16.mxu0 0
    %1424 = vmatpush1.bf16.msra.mxu0 0
    %1425 = vmatprep.subr.bf16.mxu0 0
    %1426 = vmatpush1.bf16.msra.mxu0 0
    %1427 = vmatprep.subr.bf16.mxu0 0
    %1428 = vmatpush1.bf16.msra.mxu0 0
    %1429 = vmatprep.subr.bf16.mxu0 0
    %1430 = vmatpush1.bf16.msra.mxu0 0
    %1431 = vmatprep.subr.bf16.mxu0 0
    %1432 = vmatpush1.bf16.msra.mxu0 0
    %1433 = vmatprep.subr.bf16.mxu0 0
    %1434 = vmatpush1.bf16.msra.mxu0 0
    %1435 = vmatprep.subr.bf16.mxu0 0
    %1436 = vmatpush1.bf16.msra.mxu0 0
    %1437 = vmatprep.subr.bf16.mxu0 0
    %1438 = vmatpush1.bf16.msra.mxu0 0
    %1439 = vmatprep.subr.bf16.mxu0 0
    %1440 = vmatpush1.bf16.msra.mxu0 0
    %1441 = vmatprep.subr.bf16.mxu0 0
    %1442 = vmatpush1.bf16.msra.mxu0 0
    %1443 = vmatprep.subr.bf16.mxu0 0
    %1444 = vmatpush1.bf16.msra.mxu0 0
    %1445 = vmatprep.subr.bf16.mxu0 0
    %1446 = vmatpush1.bf16.msra.mxu0 0
    %1447 = vmatprep.subr.bf16.mxu0 0
    %1448 = vmatpush1.bf16.msra.mxu0 0
    %1449 = vmatprep.mubr.bf16.mxu0 0
    %1450 = vmatmul.mubr.bf16.gmra.mrb[0].mxu0 %v1374
    %v1451 = vpop.f32.mrb[0].mxu0
    %v1452 = vadd.f32 %v1341, %v1451
    %v1453 = vpop.f32.mrb[0].mxu0
    %v1454 = vadd.f32 %v1345, %v1453
    %v1455 = vpop.f32.mrb[0].mxu0
    %v1456 = vpop.f32.mrb[0].mxu0
    %1457 = vdwg.mxu0
    %1458 = vmatprep.subr.bf16.mxu0 %v1317
    %1459 = vmatpush1.bf16.msra.mxu0 %v1316
    %1460 = vmatprep.subr.bf16.mxu0 %v1325
    %1461 = vmatpush1.bf16.msra.mxu0 %v1324
    %1462 = vmatprep.subr.bf16.mxu0 0
    %1463 = vmatpush1.bf16.msra.mxu0 0
    %1464 = vmatprep.subr.bf16.mxu0 0
    %1465 = vmatpush1.bf16.msra.mxu0 0
    %1466 = vmatprep.subr.bf16.mxu0 0
    %1467 = vmatpush1.bf16.msra.mxu0 0
    %1468 = vmatprep.subr.bf16.mxu0 0
    %1469 = vmatpush1.bf16.msra.mxu0 0
    %1470 = vmatprep.subr.bf16.mxu0 0
    %1471 = vmatpush1.bf16.msra.mxu0 0
    %1472 = vmatprep.subr.bf16.mxu0 0
    %1473 = vmatpush1.bf16.msra.mxu0 0
    %1474 = vmatprep.subr.bf16.mxu0 0
    %1475 = vmatpush1.bf16.msra.mxu0 0
    %1476 = vmatprep.subr.bf16.mxu0 0
    %1477 = vmatpush1.bf16.msra.mxu0 0
    %1478 = vmatprep.subr.bf16.mxu0 0
    %1479 = vmatpush1.bf16.msra.mxu0 0
    %1480 = vmatprep.subr.bf16.mxu0 0
    %1481 = vmatpush1.bf16.msra.mxu0 0
    %1482 = vmatprep.subr.bf16.mxu0 0
    %1483 = vmatpush1.bf16.msra.mxu0 0
    %1484 = vmatprep.subr.bf16.mxu0 0
    %1485 = vmatpush1.bf16.msra.mxu0 0
    %1486 = vmatprep.subr.bf16.mxu0 0
    %1487 = vmatpush1.bf16.msra.mxu0 0
    %1488 = vmatprep.subr.bf16.mxu0 0
    %1489 = vmatpush1.bf16.msra.mxu0 0
    %1490 = vmatprep.mubr.bf16.mxu0 0
    %1491 = vmatmul.mubr.bf16.gmra.mrb[0].mxu0 %v1374
    %v1492 = vpop.f32.mrb[0].mxu0
    %v1493 = vadd.f32 %v1349, %v1492
    %v1494 = vpop.f32.mrb[0].mxu0
    %v1495 = vadd.f32 %v1353, %v1494
    %v1496 = vpop.f32.mrb[0].mxu0
    %v1497 = vpop.f32.mrb[0].mxu0
    %1498 = vdwg.mxu0
    %1499 = vmatprep.subr.bf16.mxu0 %v1319
    %1500 = vmatpush1.bf16.msra.mxu0 %v1318
    %1501 = vmatprep.subr.bf16.mxu0 %v1327
    %1502 = vmatpush1.bf16.msra.mxu0 %v1326
    %1503 = vmatprep.subr.bf16.mxu0 0
    %1504 = vmatpush1.bf16.msra.mxu0 0
    %1505 = vmatprep.subr.bf16.mxu0 0
    %1506 = vmatpush1.bf16.msra.mxu0 0
    %1507 = vmatprep.subr.bf16.mxu0 0
    %1508 = vmatpush1.bf16.msra.mxu0 0
    %1509 = vmatprep.subr.bf16.mxu0 0
    %1510 = vmatpush1.bf16.msra.mxu0 0
    %1511 = vmatprep.subr.bf16.mxu0 0
    %1512 = vmatpush1.bf16.msra.mxu0 0
    %1513 = vmatprep.subr.bf16.mxu0 0
    %1514 = vmatpush1.bf16.msra.mxu0 0
    %1515 = vmatprep.subr.bf16.mxu0 0
    %1516 = vmatpush1.bf16.msra.mxu0 0
    %1517 = vmatprep.subr.bf16.mxu0 0
    %1518 = vmatpush1.bf16.msra.mxu0 0
    %1519 = vmatprep.subr.bf16.mxu0 0
    %1520 = vmatpush1.bf16.msra.mxu0 0
    %1521 = vmatprep.subr.bf16.mxu0 0
    %1522 = vmatpush1.bf16.msra.mxu0 0
    %1523 = vmatprep.subr.bf16.mxu0 0
    %1524 = vmatpush1.bf16.msra.mxu0 0
    %1525 = vmatprep.subr.bf16.mxu0 0
    %1526 = vmatpush1.bf16.msra.mxu0 0
    %1527 = vmatprep.subr.bf16.mxu0 0
    %1528 = vmatpush1.bf16.msra.mxu0 0
    %1529 = vmatprep.subr.bf16.mxu0 0
    %1530 = vmatpush1.bf16.msra.mxu0 0
    %1531 = vmatprep.mubr.bf16.mxu0 0
    %1532 = vmatmul.mubr.bf16.gmra.mrb[0].mxu0 %v1374
    %v1533 = vpop.f32.mrb[0].mxu0
    %v1534 = vadd.f32 %v1357, %v1533
    %v1535 = vpop.f32.mrb[0].mxu0
    %v1536 = vadd.f32 %v1361, %v1535
    %v1537 = vpop.f32.mrb[0].mxu0
    %v1538 = vpop.f32.mrb[0].mxu0
    %1539 = vdwg.mxu0
    %v1540 = vmax.f32 %v1411, 0.0
    %v1541 = vmax.f32 %v1413, 0.0
    %v1542 = vmax.f32 %v1452, 0.0
    %v1543 = vmax.f32 %v1454, 0.0
    %v1544 = vmax.f32 %v1493, 0.0
    %v1545 = vmax.f32 %v1495, 0.0
    %v1546 = vmax.f32 %v1534, 0.0
    %v1547 = vmax.f32 %v1536, 0.0
    %s1548 = smul.u32 4, 128
    %s1549 = smul.u32 %s1548, 1
    %s1550 = sshll.u32 %s1549, 4
    %1551 = dma.done %s251, %s1550
    %v1552 = vpack.c.bf16 %v1540, %v1540
    %v1553 = vpack.c.bf16 %v1541, %v1541
    %v1554 = vpack.c.bf16 %v1542, %v1542
    %v1555 = vpack.c.bf16 %v1543, %v1543
    %v1556 = vpack.c.bf16 %v1544, %v1544
    %v1557 = vpack.c.bf16 %v1545, %v1545
    %v1558 = vpack.c.bf16 %v1546, %v1546
    %v1559 = vpack.c.bf16 %v1547, %v1547
    %v1560 = vld [vmem:[#allocation3] sm:$0xff]
    %v1561 = vld [vmem:[#allocation3 + $0x8] sm:$0xff]
    %v1562 = vld [vmem:[#allocation3 + $0x10] sm:$0xff]
    %v1563 = vld [vmem:[#allocation3 + $0x18] sm:$0xff]
    %v1564 = vld [vmem:[#allocation3 + $0x20] sm:$0xff]
    %v1565 = vld [vmem:[#allocation3 + $0x28] sm:$0xff]
    %v1566 = vld [vmem:[#allocation3 + $0x30] sm:$0xff]
    %v1567 = vld [vmem:[#allocation3 + $0x38] sm:$0xff]
    %v1568 = vld [vmem:[#allocation3 + $0x40] sm:$0xff]
    %v1569 = vld [vmem:[#allocation3 + $0x48] sm:$0xff]
    %v1570 = vld [vmem:[#allocation3 + $0x50] sm:$0xff]
    %v1571 = vld [vmem:[#allocation3 + $0x58] sm:$0xff]
    %v1572 = vld [vmem:[#allocation3 + $0x60] sm:$0xff]
    %v1573 = vld [vmem:[#allocation3 + $0x68] sm:$0xff]
    %v1574 = vld [vmem:[#allocation3 + $0x70] sm:$0xff]
    %v1575 = vld [vmem:[#allocation3 + $0x78] sm:$0xff]
    %v1576 = vld [vmem:[#allocation3 + $0x80] sm:$0xff]
    %v1577 = vld [vmem:[#allocation3 + $0x88] sm:$0xff]
    %v1578 = vld [vmem:[#allocation3 + $0x90] sm:$0xff]
    %v1579 = vld [vmem:[#allocation3 + $0x98] sm:$0xff]
    %v1580 = vld [vmem:[#allocation3 + $0xa0] sm:$0xff]
    %v1581 = vld [vmem:[#allocation3 + $0xa8] sm:$0xff]
    %v1582 = vld [vmem:[#allocation3 + $0xb0] sm:$0xff]
    %v1583 = vld [vmem:[#allocation3 + $0xb8] sm:$0xff]
    %v1584 = vld [vmem:[#allocation3 + $0xc0] sm:$0xff]
    %v1585 = vld [vmem:[#allocation3 + $0xc8] sm:$0xff]
    %v1586 = vld [vmem:[#allocation3 + $0xd0] sm:$0xff]
    %v1587 = vld [vmem:[#allocation3 + $0xd8] sm:$0xff]
    %v1588 = vld [vmem:[#allocation3 + $0xe0] sm:$0xff]
    %v1589 = vld [vmem:[#allocation3 + $0xe8] sm:$0xff]
    %v1590 = vld [vmem:[#allocation3 + $0xf0] sm:$0xff]
    %v1591 = vld [vmem:[#allocation3 + $0xf8] sm:$0xff]
    %v1592 = vld [vmem:[#allocation3 + $0x100] sm:$0xff]
    %v1593 = vld [vmem:[#allocation3 + $0x108] sm:$0xff]
    %v1594 = vld [vmem:[#allocation3 + $0x110] sm:$0xff]
    %v1595 = vld [vmem:[#allocation3 + $0x118] sm:$0xff]
    %v1596 = vld [vmem:[#allocation3 + $0x120] sm:$0xff]
    %v1597 = vld [vmem:[#allocation3 + $0x128] sm:$0xff]
    %v1598 = vld [vmem:[#allocation3 + $0x130] sm:$0xff]
    %v1599 = vld [vmem:[#allocation3 + $0x138] sm:$0xff]
    %v1600 = vld [vmem:[#allocation3 + $0x140] sm:$0xff]
    %v1601 = vld [vmem:[#allocation3 + $0x148] sm:$0xff]
    %v1602 = vld [vmem:[#allocation3 + $0x150] sm:$0xff]
    %v1603 = vld [vmem:[#allocation3 + $0x158] sm:$0xff]
    %v1604 = vld [vmem:[#allocation3 + $0x160] sm:$0xff]
    %v1605 = vld [vmem:[#allocation3 + $0x168] sm:$0xff]
    %v1606 = vld [vmem:[#allocation3 + $0x170] sm:$0xff]
    %v1607 = vld [vmem:[#allocation3 + $0x178] sm:$0xff]
    %v1608 = vld [vmem:[#allocation3 + $0x180] sm:$0xff]
    %v1609 = vld [vmem:[#allocation3 + $0x188] sm:$0xff]
    %v1610 = vld [vmem:[#allocation3 + $0x190] sm:$0xff]
    %v1611 = vld [vmem:[#allocation3 + $0x198] sm:$0xff]
    %v1612 = vld [vmem:[#allocation3 + $0x1a0] sm:$0xff]
    %v1613 = vld [vmem:[#allocation3 + $0x1a8] sm:$0xff]
    %v1614 = vld [vmem:[#allocation3 + $0x1b0] sm:$0xff]
    %v1615 = vld [vmem:[#allocation3 + $0x1b8] sm:$0xff]
    %v1616 = vld [vmem:[#allocation3 + $0x1c0] sm:$0xff]
    %v1617 = vld [vmem:[#allocation3 + $0x1c8] sm:$0xff]
    %v1618 = vld [vmem:[#allocation3 + $0x1d0] sm:$0xff]
    %v1619 = vld [vmem:[#allocation3 + $0x1d8] sm:$0xff]
    %v1620 = vld [vmem:[#allocation3 + $0x1e0] sm:$0xff]
    %v1621 = vld [vmem:[#allocation3 + $0x1e8] sm:$0xff]
    %v1622 = vld [vmem:[#allocation3 + $0x1f0] sm:$0xff]
    %v1623 = vld [vmem:[#allocation3 + $0x1f8] sm:$0xff]
    %v1624 = vld [vmem:[#allocation10] sm:$0x1]
    %v1626 = vlaneseq
    %v1627 = vshrl.u32 %v1626, 7
    %v1628 = vsub.s32 0, %v1627
    %v1629 = vrot.slane %v1624, %v1628
    %1631 = vmatprep.subr.bf16.mxu0 0
    %1632 = vmatpush1.bf16.msra.mxu0 %v1560
    %1633 = vmatprep.subr.bf16.mxu0 0
    %1634 = vmatpush1.bf16.msra.mxu0 %v1561
    %1635 = vmatprep.subr.bf16.mxu0 0
    %1636 = vmatpush1.bf16.msra.mxu0 %v1562
    %1637 = vmatprep.subr.bf16.mxu0 0
    %1638 = vmatpush1.bf16.msra.mxu0 %v1563
    %1639 = vmatprep.subr.bf16.mxu0 0
    %1640 = vmatpush1.bf16.msra.mxu0 %v1564
    %1641 = vmatprep.subr.bf16.mxu0 0
    %1642 = vmatpush1.bf16.msra.mxu0 %v1565
    %1643 = vmatprep.subr.bf16.mxu0 0
    %1644 = vmatpush1.bf16.msra.mxu0 %v1566
    %1645 = vmatprep.subr.bf16.mxu0 0
    %1646 = vmatpush1.bf16.msra.mxu0 %v1567
    %1647 = vmatprep.subr.bf16.mxu0 0
    %1648 = vmatpush1.bf16.msra.mxu0 %v1568
    %1649 = vmatprep.subr.bf16.mxu0 0
    %1650 = vmatpush1.bf16.msra.mxu0 %v1569
    %1651 = vmatprep.subr.bf16.mxu0 0
    %1652 = vmatpush1.bf16.msra.mxu0 %v1570
    %1653 = vmatprep.subr.bf16.mxu0 0
    %1654 = vmatpush1.bf16.msra.mxu0 %v1571
    %1655 = vmatprep.subr.bf16.mxu0 0
    %1656 = vmatpush1.bf16.msra.mxu0 %v1572
    %1657 = vmatprep.subr.bf16.mxu0 0
    %1658 = vmatpush1.bf16.msra.mxu0 %v1573
    %1659 = vmatprep.subr.bf16.mxu0 0
    %1660 = vmatpush1.bf16.msra.mxu0 %v1574
    %1661 = vmatprep.subr.bf16.mxu0 0
    %1662 = vmatpush1.bf16.msra.mxu0 %v1575
    %1663 = vmatprep.mubr.bf16.mxu0 %v1553
    %1664 = vmatmul.mubr.bf16.gmra.mrb[0].mxu0 %v1552
    %v1665 = vpop.f32.mrb[0].mxu0
    %v1666 = vadd.f32 %v1629, %v1665
    %v1667 = vpop.f32.mrb[0].mxu0
    %v1668 = vpop.f32.mrb[0].mxu0
    %v1669 = vpop.f32.mrb[0].mxu0
    %1670 = vdwg.mxu0
    %1671 = vmatprep.subr.bf16.mxu0 0
    %1672 = vmatpush1.bf16.msra.mxu0 %v1576
    %1673 = vmatprep.subr.bf16.mxu0 0
    %1674 = vmatpush1.bf16.msra.mxu0 %v1577
    %1675 = vmatprep.subr.bf16.mxu0 0
    %1676 = vmatpush1.bf16.msra.mxu0 %v1578
    %1677 = vmatprep.subr.bf16.mxu0 0
    %1678 = vmatpush1.bf16.msra.mxu0 %v1579
    %1679 = vmatprep.subr.bf16.mxu0 0
    %1680 = vmatpush1.bf16.msra.mxu0 %v1580
    %1681 = vmatprep.subr.bf16.mxu0 0
    %1682 = vmatpush1.bf16.msra.mxu0 %v1581
    %1683 = vmatprep.subr.bf16.mxu0 0
    %1684 = vmatpush1.bf16.msra.mxu0 %v1582
    %1685 = vmatprep.subr.bf16.mxu0 0
    %1686 = vmatpush1.bf16.msra.mxu0 %v1583
    %1687 = vmatprep.subr.bf16.mxu0 0
    %1688 = vmatpush1.bf16.msra.mxu0 %v1584
    %1689 = vmatprep.subr.bf16.mxu0 0
    %1690 = vmatpush1.bf16.msra.mxu0 %v1585
    %1691 = vmatprep.subr.bf16.mxu0 0
    %1692 = vmatpush1.bf16.msra.mxu0 %v1586
    %1693 = vmatprep.subr.bf16.mxu0 0
    %1694 = vmatpush1.bf16.msra.mxu0 %v1587
    %1695 = vmatprep.subr.bf16.mxu0 0
    %1696 = vmatpush1.bf16.msra.mxu0 %v1588
    %1697 = vmatprep.subr.bf16.mxu0 0
    %1698 = vmatpush1.bf16.msra.mxu0 %v1589
    %1699 = vmatprep.subr.bf16.mxu0 0
    %1700 = vmatpush1.bf16.msra.mxu0 %v1590
    %1701 = vmatprep.subr.bf16.mxu0 0
    %1702 = vmatpush1.bf16.msra.mxu0 %v1591
    %1703 = vmatprep.mubr.bf16.mxu0 %v1555
    %1704 = vmatmul.mubr.bf16.gmra.mrb[0].mxu0 %v1554
    %v1705 = vpop.f32.mrb[0].mxu0
    %v1706 = vadd.f32 %v1666, %v1705
    %v1707 = vpop.f32.mrb[0].mxu0
    %v1708 = vpop.f32.mrb[0].mxu0
    %v1709 = vpop.f32.mrb[0].mxu0
    %1710 = vdwg.mxu0
    %1711 = vmatprep.subr.bf16.mxu0 0
    %1712 = vmatpush1.bf16.msra.mxu0 %v1592
    %1713 = vmatprep.subr.bf16.mxu0 0
    %1714 = vmatpush1.bf16.msra.mxu0 %v1593
    %1715 = vmatprep.subr.bf16.mxu0 0
    %1716 = vmatpush1.bf16.msra.mxu0 %v1594
    %1717 = vmatprep.subr.bf16.mxu0 0
    %1718 = vmatpush1.bf16.msra.mxu0 %v1595
    %1719 = vmatprep.subr.bf16.mxu0 0
    %1720 = vmatpush1.bf16.msra.mxu0 %v1596
    %1721 = vmatprep.subr.bf16.mxu0 0
    %1722 = vmatpush1.bf16.msra.mxu0 %v1597
    %1723 = vmatprep.subr.bf16.mxu0 0
    %1724 = vmatpush1.bf16.msra.mxu0 %v1598
    %1725 = vmatprep.subr.bf16.mxu0 0
    %1726 = vmatpush1.bf16.msra.mxu0 %v1599
    %1727 = vmatprep.subr.bf16.mxu0 0
    %1728 = vmatpush1.bf16.msra.mxu0 %v1600
    %1729 = vmatprep.subr.bf16.mxu0 0
    %1730 = vmatpush1.bf16.msra.mxu0 %v1601
    %1731 = vmatprep.subr.bf16.mxu0 0
    %1732 = vmatpush1.bf16.msra.mxu0 %v1602
    %1733 = vmatprep.subr.bf16.mxu0 0
    %1734 = vmatpush1.bf16.msra.mxu0 %v1603
    %1735 = vmatprep.subr.bf16.mxu0 0
    %1736 = vmatpush1.bf16.msra.mxu0 %v1604
    %1737 = vmatprep.subr.bf16.mxu0 0
    %1738 = vmatpush1.bf16.msra.mxu0 %v1605
    %1739 = vmatprep.subr.bf16.mxu0 0
    %1740 = vmatpush1.bf16.msra.mxu0 %v1606
    %1741 = vmatprep.subr.bf16.mxu0 0
    %1742 = vmatpush1.bf16.msra.mxu0 %v1607
    %1743 = vmatprep.mubr.bf16.mxu0 %v1557
    %1744 = vmatmul.mubr.bf16.gmra.mrb[0].mxu0 %v1556
    %v1745 = vpop.f32.mrb[0].mxu0
    %v1746 = vadd.f32 %v1706, %v1745
    %v1747 = vpop.f32.mrb[0].mxu0
    %v1748 = vpop.f32.mrb[0].mxu0
    %v1749 = vpop.f32.mrb[0].mxu0
    %1750 = vdwg.mxu0
    %1751 = vmatprep.subr.bf16.mxu0 0
    %1752 = vmatpush1.bf16.msra.mxu0 %v1608
    %1753 = vmatprep.subr.bf16.mxu0 0
    %1754 = vmatpush1.bf16.msra.mxu0 %v1609
    %1755 = vmatprep.subr.bf16.mxu0 0
    %1756 = vmatpush1.bf16.msra.mxu0 %v1610
    %1757 = vmatprep.subr.bf16.mxu0 0
    %1758 = vmatpush1.bf16.msra.mxu0 %v1611
    %1759 = vmatprep.subr.bf16.mxu0 0
    %1760 = vmatpush1.bf16.msra.mxu0 %v1612
    %1761 = vmatprep.subr.bf16.mxu0 0
    %1762 = vmatpush1.bf16.msra.mxu0 %v1613
    %1763 = vmatprep.subr.bf16.mxu0 0
    %1764 = vmatpush1.bf16.msra.mxu0 %v1614
    %1765 = vmatprep.subr.bf16.mxu0 0
    %1766 = vmatpush1.bf16.msra.mxu0 %v1615
    %1767 = vmatprep.subr.bf16.mxu0 0
    %1768 = vmatpush1.bf16.msra.mxu0 %v1616
    %1769 = vmatprep.subr.bf16.mxu0 0
    %1770 = vmatpush1.bf16.msra.mxu0 %v1617
    %1771 = vmatprep.subr.bf16.mxu0 0
    %1772 = vmatpush1.bf16.msra.mxu0 %v1618
    %1773 = vmatprep.subr.bf16.mxu0 0
    %1774 = vmatpush1.bf16.msra.mxu0 %v1619
    %1775 = vmatprep.subr.bf16.mxu0 0
    %1776 = vmatpush1.bf16.msra.mxu0 %v1620
    %1777 = vmatprep.subr.bf16.mxu0 0
    %1778 = vmatpush1.bf16.msra.mxu0 %v1621
    %1779 = vmatprep.subr.bf16.mxu0 0
    %1780 = vmatpush1.bf16.msra.mxu0 %v1622
    %1781 = vmatprep.subr.bf16.mxu0 0
    %1782 = vmatpush1.bf16.msra.mxu0 %v1623
    %1783 = vmatprep.mubr.bf16.mxu0 %v1559
    %1784 = vmatmul.mubr.bf16.gmra.mrb[0].mxu0 %v1558
    %v1785 = vpop.f32.mrb[0].mxu0
    %v1786 = vadd.f32 %v1746, %v1785
    %v1787 = vpop.f32.mrb[0].mxu0
    %v1788 = vpop.f32.mrb[0].mxu0
    %v1789 = vpop.f32.mrb[0].mxu0
    %1790 = vdwg.mxu0
    %1791 = vst [vmem:[%s8] sm:$0xff] %v1786
    // Predicated region
    $region83: #{lstm_model_forward.1} parent=1 // pred_check
      _
    $region84: #{lstm_model_forward.1} parent=1 // pred_check_branch
      %1793 = sbr.rel (0) target = $region86
    $region85: #{lstm_model_forward.1} parent=1 // pred_region
      _
    $region86: #{lstm_model_forward.1} parent=1 // pred_fallthru
      _
    // Predicated region
    $region87: #{lstm_model_forward.1} parent=1 // pred_check
      _
    $region88: #{lstm_model_forward.1} parent=1 // pred_check_branch
      %1795 = sbr.rel (0) target = $region90
    $region89: #{lstm_model_forward.1} parent=1 // pred_region
      _
    $region90: #{lstm_model_forward.1} parent=1 // pred_fallthru
      _
    %1796 = vsyncpa [#allocation6], 1
    %1797 = vsyncpa [#allocation8], 1
    %1798 = vsyncpa [#allocation11], 1
  %1799 = vsyncmov [#allocation4]
  %s1800 = vpop.sfrf %1799
  %p1801 = scmp.eq.s32.totalorder %s1800, 0
  %p1802 = pneg %p1801
  %1804 = shalt.err (%p1802)
  %s1805 = scalar_lea.sflag [#allocation4], 1
  %1806 = vsyncmov %s1805
  %s1807 = vpop.sfrf %1806
  %p1808 = scmp.eq.s32.totalorder %s1807, 0
  %p1809 = pneg %p1808
  %1811 = shalt.err (%p1809)

</llo_original>
